<compile_context>
chip_gen: v7x
topology: tpu7x:2x2x1
jax: 0.10.0
libtpu: 0.0.40
codegen_flags: <defaults>
</compile_context>

<pallas_src>
import functools

import jax
import jax.numpy as jnp
from jax.experimental import pallas as pl
from jax.experimental.pallas import tpu as pltpu

LN_EPS = 1e-5                      # nn.LayerNorm default eps
_VMEM_LIMIT = 32 * 1024 * 1024     # raise above v5e's 16MiB scoped default


# ------------------------------------------------------------------ utilities
def _pick_row_tile(rows, row_bytes, budget=4 << 20):
    """Largest 8-aligned power-of-two divisor of `rows` within a VMEM budget,
    preferring >= 2 grid steps so v7x's two TensorCores both get work."""
    if rows % 8 != 0:
        return rows                      # tiny / odd sizes: single full block
    cap = rows // 2 if rows >= 16 else rows
    best, t = 8, 8
    while t <= cap:
        if rows % t == 0 and t * row_bytes <= budget:
            best = t
        t *= 2
    return best


def _pick_k_tile(n, max_cols=2048, base=128):
    """Largest multiple of 128 dividing n (<= max_cols) for FFN K-tiling."""
    if n % base != 0:
        return n
    best, t = base, base
    while t <= min(n, max_cols):
        if n % t == 0:
            best = t
        t += base
    return best


def _layernorm_in_kernel(x, g, b):
    mu = jnp.mean(x, axis=-1, keepdims=True)
    xc = x - mu
    var = jnp.mean(xc * xc, axis=-1, keepdims=True)
    return xc * jax.lax.rsqrt(var + LN_EPS) * g + b


# ------------------------------------------------------- Pallas kernel bodies
def _ln_qkv_kernel(x_ref, g_ref, b_ref, w_ref, bias_ref, q_ref, k_ref, v_ref):
    # LayerNorm(x) @ W_qkv + b_qkv, split into q/k/v (each (ts, E) bf16).
    xn = _layernorm_in_kernel(x_ref[...], g_ref[...], b_ref[...])
    y = jnp.dot(xn.astype(jnp.bfloat16), w_ref[...],
                preferred_element_type=jnp.float32) + bias_ref[...]
    e = q_ref.shape[-1]
    q_ref[...] = y[:, :e].astype(q_ref.dtype)
    k_ref[...] = y[:, e:2 * e].astype(k_ref.dtype)
    v_ref[...] = y[:, 2 * e:].astype(v_ref.dtype)


def _attn_kernel(*refs, heads, scale, has_mask):
    # Per-batch multi-head attention fused with out_proj + bias + residual.
    if has_mask:
        q_ref, k_ref, v_ref, xres_ref, m_ref, wout_ref, bout_ref, o_ref = refs
    else:
        q_ref, k_ref, v_ref, xres_ref, wout_ref, bout_ref, o_ref = refs
        m_ref = None
    l, e = q_ref.shape
    hd = e // heads
    q = q_ref[...]                      # (L, E) bf16
    k = k_ref[...]
    v = v_ref[...]
    acc = xres_ref[...] + bout_ref[...]  # start from residual + out_proj bias (f32)
    for h in range(heads):
        lo = h * hd
        qh = q[:, lo:lo + hd]
        kh = k[:, lo:lo + hd]
        vh = v[:, lo:lo + hd]
        s = jax.lax.dot_general(qh, kh, (((1,), (1,)), ((), ())),
                                preferred_element_type=jnp.float32) * scale
        if m_ref is not None:
            s = s + m_ref[...]
        s = s - jnp.max(s, axis=-1, keepdims=True)
        p = jnp.exp(s)
        p = p * pl.reciprocal(jnp.sum(p, axis=-1, keepdims=True), approx=True)
        oh = jnp.dot(p.astype(jnp.bfloat16), vh,
                     preferred_element_type=jnp.float32)         # (L, hd)
        acc = acc + jnp.dot(oh.astype(jnp.bfloat16),
                            wout_ref[lo:lo + hd, :],
                            preferred_element_type=jnp.float32)  # (L, E)
    o_ref[...] = acc


def _ln_mlp_kernel(x_ref, g_ref, b_ref, wfc_ref, bfc_ref, wpj_ref, bpj_ref,
                   o_ref, xn_sc, acc_sc):
    # x + c_proj( QuickGELU( c_fc( LayerNorm(x) ) ) ), K-tiled over 4E hidden.
    kk = pl.program_id(1)

    @pl.when(kk == 0)
    def _():
        xn = _layernorm_in_kernel(x_ref[...], g_ref[...], b_ref[...])
        xn_sc[...] = xn.astype(xn_sc.dtype)          # cache LN output (bf16)
        acc_sc[...] = jnp.zeros_like(acc_sc)

    h = jnp.dot(xn_sc[...], wfc_ref[...],
                preferred_element_type=jnp.float32) + bfc_ref[...]
    h = h * (1.0 / (1.0 + jnp.exp(-1.702 * h)))      # QuickGELU
    acc_sc[...] += jnp.dot(h.astype(jnp.bfloat16), wpj_ref[...],
                           preferred_element_type=jnp.float32)

    @pl.when(kk == pl.num_programs(1) - 1)
    def _():
        o_ref[...] = (x_ref[...] + acc_sc[...] + bpj_ref[...]).astype(o_ref.dtype)


# --------------------------------------------------------- pallas_call wrappers
def ln_qkv(x, g, b, w, bias):
    rows, e = x.shape
    f = w.shape[1]                                       # 3E
    row_bytes = e * 4 + 3 * e * 2 + f * 4                # x + q/k/v + y slack
    ts = _pick_row_tile(rows, row_bytes)
    out_sds = jax.ShapeDtypeStruct((rows, e), jnp.bfloat16)
    return pl.pallas_call(
        _ln_qkv_kernel,
        out_shape=(out_sds, out_sds, out_sds),
        grid=(rows // ts,),
        in_specs=[pl.BlockSpec((ts, e), lambda i: (i, 0)),
                  pl.BlockSpec((1, e), lambda i: (0, 0)),
                  pl.BlockSpec((1, e), lambda i: (0, 0)),
                  pl.BlockSpec((e, f), lambda i: (0, 0)),
                  pl.BlockSpec((1, f), lambda i: (0, 0))],
        out_specs=(pl.BlockSpec((ts, e), lambda i: (i, 0)),
                   pl.BlockSpec((ts, e), lambda i: (i, 0)),
                   pl.BlockSpec((ts, e), lambda i: (i, 0))),
        compiler_params=pltpu.CompilerParams(
            dimension_semantics=("parallel",),
            vmem_limit_bytes=_VMEM_LIMIT),
    )(x, g.reshape(1, e), b.reshape(1, e), w, bias.reshape(1, f))


def attention_proj_res(q, k, v, x, mask, w_out, b_out, *, heads):
    # q,k,v,x: (N, L, E); fused attention + out_proj + residual, grid over batch.
    n, l, e = q.shape
    scale = 1.0 / ((e // heads) ** 0.5)
    has_mask = mask is not None

    def batch_spec():
        return pl.BlockSpec((None, l, e), lambda i: (i, 0, 0))

    in_specs = [batch_spec(), batch_spec(), batch_spec(), batch_spec()]
    args = [q, k, v, x]
    if has_mask:
        in_specs.append(pl.BlockSpec((l, l), lambda i: (0, 0)))
        args.append(mask)
    in_specs += [pl.BlockSpec((e, e), lambda i: (0, 0)),
                 pl.BlockSpec((1, e), lambda i: (0, 0))]
    args += [w_out, b_out.reshape(1, e)]

    return pl.pallas_call(
        functools.partial(_attn_kernel, heads=heads, scale=scale,
                          has_mask=has_mask),
        out_shape=jax.ShapeDtypeStruct((n, l, e), jnp.float32),
        grid=(n,),
        in_specs=in_specs,
        out_specs=pl.BlockSpec((None, l, e), lambda i: (i, 0, 0)),
        compiler_params=pltpu.CompilerParams(
            dimension_semantics=("parallel",),
            vmem_limit_bytes=_VMEM_LIMIT),
    )(*args)


def ln_mlp_residual(x, g, b, w_fc, b_fc, w_pj, b_pj):
    rows, e = x.shape
    f = w_fc.shape[1]                                    # 4E
    tf = _pick_k_tile(f)
    row_bytes = e * 4 * 2 + e * 2 + e * 4                # x + out + scratches
    ts = _pick_row_tile(rows, row_bytes)
    return pl.pallas_call(
        _ln_mlp_kernel,
        out_shape=jax.ShapeDtypeStruct((rows, e), jnp.float32),
        grid=(rows // ts, f // tf),
        in_specs=[pl.BlockSpec((ts, e), lambda i, k: (i, 0)),
                  pl.BlockSpec((1, e), lambda i, k: (0, 0)),
                  pl.BlockSpec((1, e), lambda i, k: (0, 0)),
                  pl.BlockSpec((e, tf), lambda i, k: (0, k)),
                  pl.BlockSpec((1, tf), lambda i, k: (0, k)),
                  pl.BlockSpec((tf, e), lambda i, k: (k, 0)),
                  pl.BlockSpec((1, e), lambda i, k: (0, 0))],
        out_specs=pl.BlockSpec((ts, e), lambda i, k: (i, 0)),
        scratch_shapes=[pltpu.VMEM((ts, e), jnp.bfloat16),
                        pltpu.VMEM((ts, e), jnp.float32)],
        compiler_params=pltpu.CompilerParams(
            dimension_semantics=("parallel", "arbitrary"),
            vmem_limit_bytes=_VMEM_LIMIT),
    )(x, g.reshape(1, e), b.reshape(1, e),
      w_fc, b_fc.reshape(1, f), w_pj, b_pj.reshape(1, e))


# ------------------------------------------------------------------- JAX glue
def resblock_forward(x, p, mask, *, heads):
    # x: (N, L, E) batch-major internal layout.
    n, l, e = x.shape
    rows = n * l
    x2 = x.reshape(rows, e)

    # --- x = x + out_proj(MHA(ln_1(x)))   (out_proj + residual fused in kernel)
    q, k, v = ln_qkv(x2, p["ln1_g"], p["ln1_b"], p["w_qkv"], p["b_qkv"])
    x = attention_proj_res(q.reshape(n, l, e), k.reshape(n, l, e),
                           v.reshape(n, l, e), x, mask,
                           p["w_out"], p["b_out"], heads=heads)

    # --- x = x + mlp(ln_2(x))
    x2 = ln_mlp_residual(x.reshape(rows, e), p["ln2_g"], p["ln2_b"],
                         p["w_fc"], p["b_fc"], p["w_pj"], p["b_pj"])
    return x2.reshape(n, l, e)


@functools.partial(jax.jit, static_argnames=("heads",))
def transformer_forward(x, params, mask, *, heads):
    # x: (L, N, E) — matches the PyTorch (seq, batch, width) layout.
    x = jnp.transpose(x, (1, 0, 2))          # one transpose for the whole net
    for p in params:
        x = resblock_forward(x, p, mask, heads=heads)
    return jnp.transpose(x, (1, 0, 2))


# -------------------------------------------------------------- params / refs
def init_layer_params(key, width):
    e = width
    ks = jax.random.split(key, 10)

    def lin_w(k, fan_in, fan_out):
        bound = 1.0 / (fan_in ** 0.5)
        w = jax.random.uniform(k, (fan_in, fan_out), jnp.float32, -bound, bound)
        return w.astype(jnp.bfloat16)        # weights stored bf16 (MXU native)

    return {
        "ln1_g": 1.0 + 0.1 * jax.random.normal(ks[0], (e,), jnp.float32),
        "ln1_b": 0.1 * jax.random.normal(ks[1], (e,), jnp.float32),
        "ln2_g": 1.0 + 0.1 * jax.random.normal(ks[2], (e,), jnp.float32),
        "ln2_b": 0.1 * jax.random.normal(ks[3], (e,), jnp.float32),
        "w_qkv": lin_w(ks[4], e, 3 * e),
        "b_qkv": 0.1 * jax.random.normal(ks[5], (3 * e,), jnp.float32),
        "w_out": lin_w(ks[6], e, e),
        "b_out": 0.1 * jax.random.normal(ks[7], (e,), jnp.float32),
        "w_fc": lin_w(ks[8], e, 4 * e),
        "b_fc": jnp.zeros((4 * e,), jnp.float32),
        "w_pj": lin_w(ks[9], 4 * e, e),
        "b_pj": jnp.zeros((e,), jnp.float32),
    }


def _ref_layernorm(x, g, b):
    mu = x.mean(-1, keepdims=True)
    var = ((x - mu) ** 2).mean(-1, keepdims=True)
    return (x - mu) / jnp.sqrt(var + LN_EPS) * g + b


def _ref_resblock(x, p, mask, heads):
    # Pure-JAX reference in (L, N, E) layout, mirroring the kernel's bf16 casts.
    bf16 = jnp.bfloat16
    L, N, E = x.shape
    hd = E // heads
    h = _ref_layernorm(x, p["ln1_g"], p["ln1_b"])
    qkv = jnp.dot(h.reshape(L * N, E).astype(bf16), p["w_qkv"],
                  preferred_element_type=jnp.float32) + p["b_qkv"]
    qkv = qkv.astype(bf16).reshape(L, N, 3, heads, hd)
    qkv = jnp.transpose(qkv, (2, 1, 3, 0, 4))      # (3, N, H, L, hd)
    q, k, v = qkv[0], qkv[1], qkv[2]
    s = jnp.einsum("bhqd,bhkd->bhqk", q, k,
                   preferred_element_type=jnp.float32) / (hd ** 0.5)
    if mask is not None:
        s = s + mask
    pa = jax.nn.softmax(s, axis=-1)
    a = jnp.einsum("bhqk,bhkd->bhqd", pa.astype(bf16), v,
                   preferred_element_type=jnp.float32)
    a = jnp.transpose(a, (2, 0, 1, 3)).reshape(L * N, E)
    proj = jnp.dot(a.astype(bf16), p["w_out"],
                   preferred_element_type=jnp.float32) + p["b_out"]
    x = x + proj.reshape(L, N, E)
    xn2 = _ref_layernorm(x, p["ln2_g"], p["ln2_b"]).reshape(L * N, E)
    hf = jnp.dot(xn2.astype(bf16), p["w_fc"],
                 preferred_element_type=jnp.float32) + p["b_fc"]
    hf = hf * jax.nn.sigmoid(1.702 * hf)
    proj2 = jnp.dot(hf.astype(bf16), p["w_pj"],
                    preferred_element_type=jnp.float32) + p["b_pj"]
    x = x + proj2.reshape(L, N, E)
    return x


def _ref_forward(x, params, mask, heads):
    for p in params:
        x = _ref_resblock(x, p, mask, heads)
    return x


# ---------------------------------------------------------------------- main
if __name__ == "__main__":
    key = jax.random.PRNGKey(0)
    kx, kp = jax.random.split(key)

    SEQ, BATCH, WIDTH, HEADS, LAYERS = 8, 2, 32, 4, 2   # (L, N, E) input layout

    x = jax.random.normal(kx, (SEQ, BATCH, WIDTH), jnp.float32)
    params = [init_layer_params(k, WIDTH) for k in jax.random.split(kp, LAYERS)]
    mask = None   # Transformer default attn_mask=None (mask path skipped)

    out = jax.block_until_ready(
        transformer_forward(x, params, mask, heads=HEADS))
    ref = jax.block_until_ready(_ref_forward(x, params, mask, HEADS))

    assert out.shape == (SEQ, BATCH, WIDTH), out.shape
    err = float(jnp.max(jnp.abs(out - ref)))
    assert err < 2e-2, f"max abs error vs reference: {err}"
    print("KERNEL_OK")
</pallas_src>

<mosaic_0001>
module attributes {stable_mosaic.version = 11 : i64} {
  func.func @_attn_kernel(%arg0: i32, %arg1: memref<1x8x32xbf16, #tpu.memory_space<vmem>>, %arg2: memref<1x8x32xbf16, #tpu.memory_space<vmem>>, %arg3: memref<1x8x32xbf16, #tpu.memory_space<vmem>>, %arg4: memref<1x8x32xf32, #tpu.memory_space<vmem>>, %arg5: memref<32x32xbf16, #tpu.memory_space<vmem>>, %arg6: memref<1x32xf32, #tpu.memory_space<vmem>>, %arg7: memref<1x8x32xf32, #tpu.memory_space<vmem>>) attributes {dimension_semantics = [#tpu.dimension_semantics<parallel>], iteration_bounds = array<i64: 2>, scalar_prefetch = 0 : i64, scratch_operands = 0 : i64, tpu.core_type = #tpu.core_type<tc>, window_params = [{transform_indices = @transform_0, window_bounds = array<i64: 1, 8, 32>}, {transform_indices = @transform_1, window_bounds = array<i64: 1, 8, 32>}, {transform_indices = @transform_2, window_bounds = array<i64: 1, 8, 32>}, {transform_indices = @transform_3, window_bounds = array<i64: 1, 8, 32>}, {pipeline_mode = #tpu.pipeline_mode<synchronous>, transform_indices = @transform_4, window_bounds = array<i64: 32, 32>}, {pipeline_mode = #tpu.pipeline_mode<synchronous>, transform_indices = @transform_5, window_bounds = array<i64: 1, 32>}, {transform_indices = @transform_6, window_bounds = array<i64: 1, 8, 32>}]} {
    %c0 = arith.constant 0 : index
    %c0_0 = arith.constant 0 : index
    %c0_1 = arith.constant 0 : index
    %0 = vector.load %arg1[%c0, %c0_0, %c0_1] : memref<1x8x32xbf16, #tpu.memory_space<vmem>>, vector<1x8x32xbf16>
    %1 = vector.shape_cast %0 : vector<1x8x32xbf16> to vector<8x32xbf16>
    %c0_2 = arith.constant 0 : index
    %c0_3 = arith.constant 0 : index
    %c0_4 = arith.constant 0 : index
    %2 = vector.load %arg2[%c0_2, %c0_3, %c0_4] : memref<1x8x32xbf16, #tpu.memory_space<vmem>>, vector<1x8x32xbf16>
    %3 = vector.shape_cast %2 : vector<1x8x32xbf16> to vector<8x32xbf16>
    %c0_5 = arith.constant 0 : index
    %c0_6 = arith.constant 0 : index
    %c0_7 = arith.constant 0 : index
    %4 = vector.load %arg3[%c0_5, %c0_6, %c0_7] : memref<1x8x32xbf16, #tpu.memory_space<vmem>>, vector<1x8x32xbf16>
    %5 = vector.shape_cast %4 : vector<1x8x32xbf16> to vector<8x32xbf16>
    %c0_8 = arith.constant 0 : index
    %c0_9 = arith.constant 0 : index
    %c0_10 = arith.constant 0 : index
    %6 = vector.load %arg4[%c0_8, %c0_9, %c0_10] : memref<1x8x32xf32, #tpu.memory_space<vmem>>, vector<1x8x32xf32>
    %7 = vector.shape_cast %6 : vector<1x8x32xf32> to vector<8x32xf32>
    %c0_11 = arith.constant 0 : index
    %c0_12 = arith.constant 0 : index
    %8 = vector.load %arg6[%c0_11, %c0_12] : memref<1x32xf32, #tpu.memory_space<vmem>>, vector<1x32xf32>
    %9 = vector.broadcast %8 : vector<1x32xf32> to vector<8x32xf32>
    %10 = arith.addf %7, %9 : vector<8x32xf32>
    %11 = vector.extract_strided_slice %1 {offsets = [0, 0], sizes = [8, 8], strides = [1, 1]} : vector<8x32xbf16> to vector<8x8xbf16>
    %12 = vector.extract_strided_slice %3 {offsets = [0, 0], sizes = [8, 8], strides = [1, 1]} : vector<8x32xbf16> to vector<8x8xbf16>
    %13 = vector.extract_strided_slice %5 {offsets = [0, 0], sizes = [8, 8], strides = [1, 1]} : vector<8x32xbf16> to vector<8x8xbf16>
    %cst = arith.constant dense<0.000000e+00> : vector<8x8xf32>
    %14 = tpu.matmul %11, %12, %cst {dimension_numbers = #tpu.dot_dimension_numbers<[1], [1], [0], [0], [0, 0, 1, 0], [], []>} : vector<8x8xbf16>, vector<8x8xbf16>, vector<8x8xf32> -> vector<8x8xf32>
    %cst_13 = arith.constant 0.353553385 : f32
    %15 = vector.broadcast %cst_13 : f32 to vector<8x8xf32>
    %16 = arith.mulf %14, %15 : vector<8x8xf32>
    %cst_14 = arith.constant dense<0xFF800000> : vector<8xf32>
    %17 = vector.multi_reduction <maximumf>, %16, %cst_14 [1] : vector<8x8xf32> to vector<8xf32>
    %18 = vector.shape_cast %17 : vector<8xf32> to vector<8x1xf32>
    %19 = vector.broadcast %18 : vector<8x1xf32> to vector<8x8xf32>
    %20 = arith.subf %16, %19 : vector<8x8xf32>
    %21 = math.exp %20 : vector<8x8xf32>
    %cst_15 = arith.constant dense<0.000000e+00> : vector<8xf32>
    %22 = vector.multi_reduction <add>, %21, %cst_15 [1] : vector<8x8xf32> to vector<8xf32>
    %23 = vector.shape_cast %22 : vector<8xf32> to vector<8x1xf32>
    %24 = tpu.reciprocal %23 {approx = true} : vector<8x1xf32> -> vector<8x1xf32>
    %25 = vector.broadcast %24 : vector<8x1xf32> to vector<8x8xf32>
    %26 = arith.mulf %21, %25 : vector<8x8xf32>
    %27 = arith.truncf %26 : vector<8x8xf32> to vector<8x8xbf16>
    %cst_16 = arith.constant dense<0.000000e+00> : vector<8x8xf32>
    %28 = tpu.matmul %27, %13, %cst_16 {dimension_numbers = #tpu.dot_dimension_numbers<[1], [0], [0], [1], [0, 0, 1, 1], [], []>} : vector<8x8xbf16>, vector<8x8xbf16>, vector<8x8xf32> -> vector<8x8xf32>
    %29 = arith.truncf %28 : vector<8x8xf32> to vector<8x8xbf16>
    %c0_17 = arith.constant 0 : index
    %c0_18 = arith.constant 0 : index
    %30 = vector.load %arg5[%c0_17, %c0_18] : memref<32x32xbf16, #tpu.memory_space<vmem>>, vector<8x32xbf16>
    %cst_19 = arith.constant dense<0.000000e+00> : vector<8x32xf32>
    %31 = tpu.matmul %29, %30, %cst_19 {dimension_numbers = #tpu.dot_dimension_numbers<[1], [0], [0], [1], [0, 0, 1, 1], [], []>} : vector<8x8xbf16>, vector<8x32xbf16>, vector<8x32xf32> -> vector<8x32xf32>
    %32 = arith.addf %10, %31 : vector<8x32xf32>
    %33 = vector.extract_strided_slice %1 {offsets = [0, 8], sizes = [8, 8], strides = [1, 1]} : vector<8x32xbf16> to vector<8x8xbf16>
    %34 = vector.extract_strided_slice %3 {offsets = [0, 8], sizes = [8, 8], strides = [1, 1]} : vector<8x32xbf16> to vector<8x8xbf16>
    %35 = vector.extract_strided_slice %5 {offsets = [0, 8], sizes = [8, 8], strides = [1, 1]} : vector<8x32xbf16> to vector<8x8xbf16>
    %cst_20 = arith.constant dense<0.000000e+00> : vector<8x8xf32>
    %36 = tpu.matmul %33, %34, %cst_20 {dimension_numbers = #tpu.dot_dimension_numbers<[1], [1], [0], [0], [0, 0, 1, 0], [], []>} : vector<8x8xbf16>, vector<8x8xbf16>, vector<8x8xf32> -> vector<8x8xf32>
    %cst_21 = arith.constant 0.353553385 : f32
    %37 = vector.broadcast %cst_21 : f32 to vector<8x8xf32>
    %38 = arith.mulf %36, %37 : vector<8x8xf32>
    %cst_22 = arith.constant dense<0xFF800000> : vector<8xf32>
    %39 = vector.multi_reduction <maximumf>, %38, %cst_22 [1] : vector<8x8xf32> to vector<8xf32>
    %40 = vector.shape_cast %39 : vector<8xf32> to vector<8x1xf32>
    %41 = vector.broadcast %40 : vector<8x1xf32> to vector<8x8xf32>
    %42 = arith.subf %38, %41 : vector<8x8xf32>
    %43 = math.exp %42 : vector<8x8xf32>
    %cst_23 = arith.constant dense<0.000000e+00> : vector<8xf32>
    %44 = vector.multi_reduction <add>, %43, %cst_23 [1] : vector<8x8xf32> to vector<8xf32>
    %45 = vector.shape_cast %44 : vector<8xf32> to vector<8x1xf32>
    %46 = tpu.reciprocal %45 {approx = true} : vector<8x1xf32> -> vector<8x1xf32>
    %47 = vector.broadcast %46 : vector<8x1xf32> to vector<8x8xf32>
    %48 = arith.mulf %43, %47 : vector<8x8xf32>
    %49 = arith.truncf %48 : vector<8x8xf32> to vector<8x8xbf16>
    %cst_24 = arith.constant dense<0.000000e+00> : vector<8x8xf32>
    %50 = tpu.matmul %49, %35, %cst_24 {dimension_numbers = #tpu.dot_dimension_numbers<[1], [0], [0], [1], [0, 0, 1, 1], [], []>} : vector<8x8xbf16>, vector<8x8xbf16>, vector<8x8xf32> -> vector<8x8xf32>
    %51 = arith.truncf %50 : vector<8x8xf32> to vector<8x8xbf16>
    %c8 = arith.constant 8 : index
    %c0_25 = arith.constant 0 : index
    %52 = vector.load %arg5[%c8, %c0_25] : memref<32x32xbf16, #tpu.memory_space<vmem>>, vector<8x32xbf16>
    %cst_26 = arith.constant dense<0.000000e+00> : vector<8x32xf32>
    %53 = tpu.matmul %51, %52, %cst_26 {dimension_numbers = #tpu.dot_dimension_numbers<[1], [0], [0], [1], [0, 0, 1, 1], [], []>} : vector<8x8xbf16>, vector<8x32xbf16>, vector<8x32xf32> -> vector<8x32xf32>
    %54 = arith.addf %32, %53 : vector<8x32xf32>
    %55 = vector.extract_strided_slice %1 {offsets = [0, 16], sizes = [8, 8], strides = [1, 1]} : vector<8x32xbf16> to vector<8x8xbf16>
    %56 = vector.extract_strided_slice %3 {offsets = [0, 16], sizes = [8, 8], strides = [1, 1]} : vector<8x32xbf16> to vector<8x8xbf16>
    %57 = vector.extract_strided_slice %5 {offsets = [0, 16], sizes = [8, 8], strides = [1, 1]} : vector<8x32xbf16> to vector<8x8xbf16>
    %cst_27 = arith.constant dense<0.000000e+00> : vector<8x8xf32>
    %58 = tpu.matmul %55, %56, %cst_27 {dimension_numbers = #tpu.dot_dimension_numbers<[1], [1], [0], [0], [0, 0, 1, 0], [], []>} : vector<8x8xbf16>, vector<8x8xbf16>, vector<8x8xf32> -> vector<8x8xf32>
    %cst_28 = arith.constant 0.353553385 : f32
    %59 = vector.broadcast %cst_28 : f32 to vector<8x8xf32>
    %60 = arith.mulf %58, %59 : vector<8x8xf32>
    %cst_29 = arith.constant dense<0xFF800000> : vector<8xf32>
    %61 = vector.multi_reduction <maximumf>, %60, %cst_29 [1] : vector<8x8xf32> to vector<8xf32>
    %62 = vector.shape_cast %61 : vector<8xf32> to vector<8x1xf32>
    %63 = vector.broadcast %62 : vector<8x1xf32> to vector<8x8xf32>
    %64 = arith.subf %60, %63 : vector<8x8xf32>
    %65 = math.exp %64 : vector<8x8xf32>
    %cst_30 = arith.constant dense<0.000000e+00> : vector<8xf32>
    %66 = vector.multi_reduction <add>, %65, %cst_30 [1] : vector<8x8xf32> to vector<8xf32>
    %67 = vector.shape_cast %66 : vector<8xf32> to vector<8x1xf32>
    %68 = tpu.reciprocal %67 {approx = true} : vector<8x1xf32> -> vector<8x1xf32>
    %69 = vector.broadcast %68 : vector<8x1xf32> to vector<8x8xf32>
    %70 = arith.mulf %65, %69 : vector<8x8xf32>
    %71 = arith.truncf %70 : vector<8x8xf32> to vector<8x8xbf16>
    %cst_31 = arith.constant dense<0.000000e+00> : vector<8x8xf32>
    %72 = tpu.matmul %71, %57, %cst_31 {dimension_numbers = #tpu.dot_dimension_numbers<[1], [0], [0], [1], [0, 0, 1, 1], [], []>} : vector<8x8xbf16>, vector<8x8xbf16>, vector<8x8xf32> -> vector<8x8xf32>
    %73 = arith.truncf %72 : vector<8x8xf32> to vector<8x8xbf16>
    %c16 = arith.constant 16 : index
    %c0_32 = arith.constant 0 : index
    %74 = vector.load %arg5[%c16, %c0_32] : memref<32x32xbf16, #tpu.memory_space<vmem>>, vector<8x32xbf16>
    %cst_33 = arith.constant dense<0.000000e+00> : vector<8x32xf32>
    %75 = tpu.matmul %73, %74, %cst_33 {dimension_numbers = #tpu.dot_dimension_numbers<[1], [0], [0], [1], [0, 0, 1, 1], [], []>} : vector<8x8xbf16>, vector<8x32xbf16>, vector<8x32xf32> -> vector<8x32xf32>
    %76 = arith.addf %54, %75 : vector<8x32xf32>
    %77 = vector.extract_strided_slice %1 {offsets = [0, 24], sizes = [8, 8], strides = [1, 1]} : vector<8x32xbf16> to vector<8x8xbf16>
    %78 = vector.extract_strided_slice %3 {offsets = [0, 24], sizes = [8, 8], strides = [1, 1]} : vector<8x32xbf16> to vector<8x8xbf16>
    %79 = vector.extract_strided_slice %5 {offsets = [0, 24], sizes = [8, 8], strides = [1, 1]} : vector<8x32xbf16> to vector<8x8xbf16>
    %cst_34 = arith.constant dense<0.000000e+00> : vector<8x8xf32>
    %80 = tpu.matmul %77, %78, %cst_34 {dimension_numbers = #tpu.dot_dimension_numbers<[1], [1], [0], [0], [0, 0, 1, 0], [], []>} : vector<8x8xbf16>, vector<8x8xbf16>, vector<8x8xf32> -> vector<8x8xf32>
    %cst_35 = arith.constant 0.353553385 : f32
    %81 = vector.broadcast %cst_35 : f32 to vector<8x8xf32>
    %82 = arith.mulf %80, %81 : vector<8x8xf32>
    %cst_36 = arith.constant dense<0xFF800000> : vector<8xf32>
    %83 = vector.multi_reduction <maximumf>, %82, %cst_36 [1] : vector<8x8xf32> to vector<8xf32>
    %84 = vector.shape_cast %83 : vector<8xf32> to vector<8x1xf32>
    %85 = vector.broadcast %84 : vector<8x1xf32> to vector<8x8xf32>
    %86 = arith.subf %82, %85 : vector<8x8xf32>
    %87 = math.exp %86 : vector<8x8xf32>
    %cst_37 = arith.constant dense<0.000000e+00> : vector<8xf32>
    %88 = vector.multi_reduction <add>, %87, %cst_37 [1] : vector<8x8xf32> to vector<8xf32>
    %89 = vector.shape_cast %88 : vector<8xf32> to vector<8x1xf32>
    %90 = tpu.reciprocal %89 {approx = true} : vector<8x1xf32> -> vector<8x1xf32>
    %91 = vector.broadcast %90 : vector<8x1xf32> to vector<8x8xf32>
    %92 = arith.mulf %87, %91 : vector<8x8xf32>
    %93 = arith.truncf %92 : vector<8x8xf32> to vector<8x8xbf16>
    %cst_38 = arith.constant dense<0.000000e+00> : vector<8x8xf32>
    %94 = tpu.matmul %93, %79, %cst_38 {dimension_numbers = #tpu.dot_dimension_numbers<[1], [0], [0], [1], [0, 0, 1, 1], [], []>} : vector<8x8xbf16>, vector<8x8xbf16>, vector<8x8xf32> -> vector<8x8xf32>
    %95 = arith.truncf %94 : vector<8x8xf32> to vector<8x8xbf16>
    %c24 = arith.constant 24 : index
    %c0_39 = arith.constant 0 : index
    %96 = vector.load %arg5[%c24, %c0_39] : memref<32x32xbf16, #tpu.memory_space<vmem>>, vector<8x32xbf16>
    %cst_40 = arith.constant dense<0.000000e+00> : vector<8x32xf32>
    %97 = tpu.matmul %95, %96, %cst_40 {dimension_numbers = #tpu.dot_dimension_numbers<[1], [0], [0], [1], [0, 0, 1, 1], [], []>} : vector<8x8xbf16>, vector<8x32xbf16>, vector<8x32xf32> -> vector<8x32xf32>
    %98 = arith.addf %76, %97 : vector<8x32xf32>
    %c0_41 = arith.constant 0 : index
    %c0_42 = arith.constant 0 : index
    %c0_43 = arith.constant 0 : index
    %99 = vector.load %arg7[%c0_41, %c0_42, %c0_43] : memref<1x8x32xf32, #tpu.memory_space<vmem>>, vector<1x8x32xf32>
    %100 = vector.shape_cast %99 : vector<1x8x32xf32> to vector<8x32xf32>
    %101 = vector.shape_cast %98 : vector<8x32xf32> to vector<1x8x32xf32>
    tpu.vector_store %arg7[%c0_41, %c0_42, %c0_43], %101 {strides = array<i32>} : memref<1x8x32xf32, #tpu.memory_space<vmem>>, vector<1x8x32xf32>,
    return
  }
  func.func @transform_0(%arg0: i32) -> (i32, i32, i32) {
    %c0_i32 = arith.constant 0 : i32
    %c0_i32_0 = arith.constant 0 : i32
    %c0_i32_1 = arith.constant 0 : i32
    return %arg0, %c0_i32, %c0_i32_0 : i32, i32, i32
  }
  func.func @transform_1(%arg0: i32) -> (i32, i32, i32) {
    %c0_i32 = arith.constant 0 : i32
    %c0_i32_0 = arith.constant 0 : i32
    %c0_i32_1 = arith.constant 0 : i32
    return %arg0, %c0_i32, %c0_i32_0 : i32, i32, i32
  }
  func.func @transform_2(%arg0: i32) -> (i32, i32, i32) {
    %c0_i32 = arith.constant 0 : i32
    %c0_i32_0 = arith.constant 0 : i32
    %c0_i32_1 = arith.constant 0 : i32
    return %arg0, %c0_i32, %c0_i32_0 : i32, i32, i32
  }
  func.func @transform_3(%arg0: i32) -> (i32, i32, i32) {
    %c0_i32 = arith.constant 0 : i32
    %c0_i32_0 = arith.constant 0 : i32
    %c0_i32_1 = arith.constant 0 : i32
    return %arg0, %c0_i32, %c0_i32_0 : i32, i32, i32
  }
  func.func @transform_4(%arg0: i32) -> (i32, i32) {
    %c0_i32 = arith.constant 0 : i32
    %c0_i32_0 = arith.constant 0 : i32
    %c0_i32_1 = arith.constant 0 : i32
    return %c0_i32, %c0_i32_0 : i32, i32
  }
  func.func @transform_5(%arg0: i32) -> (i32, i32) {
    %c0_i32 = arith.constant 0 : i32
    %c0_i32_0 = arith.constant 0 : i32
    %c0_i32_1 = arith.constant 0 : i32
    return %c0_i32, %c0_i32_0 : i32, i32
  }
  func.func @transform_6(%arg0: i32) -> (i32, i32, i32) {
    %c0_i32 = arith.constant 0 : i32
    %c0_i32_0 = arith.constant 0 : i32
    %c0_i32_1 = arith.constant 0 : i32
    return %arg0, %c0_i32, %c0_i32_0 : i32, i32, i32
  }
}

module attributes {stable_mosaic.version = 11 : i64} {
  func.func @_ln_qkv_kernel(%arg0: i32, %arg1: memref<8x32xf32, #tpu.memory_space<vmem>>, %arg2: memref<1x32xf32, #tpu.memory_space<vmem>>, %arg3: memref<1x32xf32, #tpu.memory_space<vmem>>, %arg4: memref<32x96xbf16, #tpu.memory_space<vmem>>, %arg5: memref<1x96xf32, #tpu.memory_space<vmem>>, %arg6: memref<8x32xbf16, #tpu.memory_space<vmem>>, %arg7: memref<8x32xbf16, #tpu.memory_space<vmem>>, %arg8: memref<8x32xbf16, #tpu.memory_space<vmem>>) attributes {dimension_semantics = [#tpu.dimension_semantics<parallel>], iteration_bounds = array<i64: 2>, scalar_prefetch = 0 : i64, scratch_operands = 0 : i64, tpu.core_type = #tpu.core_type<tc>, window_params = [{transform_indices = @transform_0, window_bounds = array<i64: 8, 32>}, {pipeline_mode = #tpu.pipeline_mode<synchronous>, transform_indices = @transform_1, window_bounds = array<i64: 1, 32>}, {pipeline_mode = #tpu.pipeline_mode<synchronous>, transform_indices = @transform_2, window_bounds = array<i64: 1, 32>}, {pipeline_mode = #tpu.pipeline_mode<synchronous>, transform_indices = @transform_3, window_bounds = array<i64: 32, 96>}, {pipeline_mode = #tpu.pipeline_mode<synchronous>, transform_indices = @transform_4, window_bounds = array<i64: 1, 96>}, {transform_indices = @transform_5, window_bounds = array<i64: 8, 32>}, {transform_indices = @transform_6, window_bounds = array<i64: 8, 32>}, {transform_indices = @transform_7, window_bounds = array<i64: 8, 32>}]} {
    %c0 = arith.constant 0 : index
    %c0_0 = arith.constant 0 : index
    %0 = vector.load %arg1[%c0, %c0_0] : memref<8x32xf32, #tpu.memory_space<vmem>>, vector<8x32xf32>
    %c0_1 = arith.constant 0 : index
    %c0_2 = arith.constant 0 : index
    %1 = vector.load %arg2[%c0_1, %c0_2] : memref<1x32xf32, #tpu.memory_space<vmem>>, vector<1x32xf32>
    %c0_3 = arith.constant 0 : index
    %c0_4 = arith.constant 0 : index
    %2 = vector.load %arg3[%c0_3, %c0_4] : memref<1x32xf32, #tpu.memory_space<vmem>>, vector<1x32xf32>
    %cst = arith.constant dense<0.000000e+00> : vector<8xf32>
    %3 = vector.multi_reduction <add>, %0, %cst [1] : vector<8x32xf32> to vector<8xf32>
    %4 = vector.shape_cast %3 : vector<8xf32> to vector<8x1xf32>
    %cst_5 = arith.constant 3.200000e+01 : f32
    %5 = vector.broadcast %cst_5 : f32 to vector<8x1xf32>
    %6 = arith.divf %4, %5 : vector<8x1xf32>
    %7 = vector.broadcast %6 : vector<8x1xf32> to vector<8x32xf32>
    %8 = arith.subf %0, %7 : vector<8x32xf32>
    %9 = arith.mulf %8, %8 : vector<8x32xf32>
    %cst_6 = arith.constant dense<0.000000e+00> : vector<8xf32>
    %10 = vector.multi_reduction <add>, %9, %cst_6 [1] : vector<8x32xf32> to vector<8xf32>
    %11 = vector.shape_cast %10 : vector<8xf32> to vector<8x1xf32>
    %cst_7 = arith.constant 3.200000e+01 : f32
    %12 = vector.broadcast %cst_7 : f32 to vector<8x1xf32>
    %13 = arith.divf %11, %12 : vector<8x1xf32>
    %cst_8 = arith.constant 9.99999974E-6 : f32
    %14 = vector.broadcast %cst_8 : f32 to vector<8x1xf32>
    %15 = arith.addf %13, %14 : vector<8x1xf32>
    %16 = math.rsqrt %15 : vector<8x1xf32>
    %17 = vector.broadcast %16 : vector<8x1xf32> to vector<8x32xf32>
    %18 = arith.mulf %8, %17 : vector<8x32xf32>
    %19 = vector.broadcast %1 : vector<1x32xf32> to vector<8x32xf32>
    %20 = arith.mulf %18, %19 : vector<8x32xf32>
    %21 = vector.broadcast %2 : vector<1x32xf32> to vector<8x32xf32>
    %22 = arith.addf %20, %21 : vector<8x32xf32>
    %23 = arith.truncf %22 : vector<8x32xf32> to vector<8x32xbf16>
    %c0_9 = arith.constant 0 : index
    %c0_10 = arith.constant 0 : index
    %24 = vector.load %arg4[%c0_9, %c0_10] : memref<32x96xbf16, #tpu.memory_space<vmem>>, vector<32x96xbf16>
    %cst_11 = arith.constant dense<0.000000e+00> : vector<8x96xf32>
    %25 = tpu.matmul %23, %24, %cst_11 {dimension_numbers = #tpu.dot_dimension_numbers<[1], [0], [0], [1], [0, 0, 1, 1], [], []>} : vector<8x32xbf16>, vector<32x96xbf16>, vector<8x96xf32> -> vector<8x96xf32>
    %c0_12 = arith.constant 0 : index
    %c0_13 = arith.constant 0 : index
    %26 = vector.load %arg5[%c0_12, %c0_13] : memref<1x96xf32, #tpu.memory_space<vmem>>, vector<1x96xf32>
    %27 = vector.broadcast %26 : vector<1x96xf32> to vector<8x96xf32>
    %28 = arith.addf %25, %27 : vector<8x96xf32>
    %29 = vector.extract_strided_slice %28 {offsets = [0, 0], sizes = [8, 32], strides = [1, 1]} : vector<8x96xf32> to vector<8x32xf32>
    %30 = arith.truncf %29 : vector<8x32xf32> to vector<8x32xbf16>
    %c0_14 = arith.constant 0 : index
    %c0_15 = arith.constant 0 : index
    %31 = vector.load %arg6[%c0_14, %c0_15] : memref<8x32xbf16, #tpu.memory_space<vmem>>, vector<8x32xbf16>
    tpu.vector_store %arg6[%c0_14, %c0_15], %30 {strides = array<i32>} : memref<8x32xbf16, #tpu.memory_space<vmem>>, vector<8x32xbf16>,
    %32 = vector.extract_strided_slice %28 {offsets = [0, 32], sizes = [8, 32], strides = [1, 1]} : vector<8x96xf32> to vector<8x32xf32>
    %33 = arith.truncf %32 : vector<8x32xf32> to vector<8x32xbf16>
    %c0_16 = arith.constant 0 : index
    %c0_17 = arith.constant 0 : index
    %34 = vector.load %arg7[%c0_16, %c0_17] : memref<8x32xbf16, #tpu.memory_space<vmem>>, vector<8x32xbf16>
    tpu.vector_store %arg7[%c0_16, %c0_17], %33 {strides = array<i32>} : memref<8x32xbf16, #tpu.memory_space<vmem>>, vector<8x32xbf16>,
    %35 = vector.extract_strided_slice %28 {offsets = [0, 64], sizes = [8, 32], strides = [1, 1]} : vector<8x96xf32> to vector<8x32xf32>
    %36 = arith.truncf %35 : vector<8x32xf32> to vector<8x32xbf16>
    %c0_18 = arith.constant 0 : index
    %c0_19 = arith.constant 0 : index
    %37 = vector.load %arg8[%c0_18, %c0_19] : memref<8x32xbf16, #tpu.memory_space<vmem>>, vector<8x32xbf16>
    tpu.vector_store %arg8[%c0_18, %c0_19], %36 {strides = array<i32>} : memref<8x32xbf16, #tpu.memory_space<vmem>>, vector<8x32xbf16>,
    return
  }
  func.func @transform_0(%arg0: i32) -> (i32, i32) {
    %c0_i32 = arith.constant 0 : i32
    %c0_i32_0 = arith.constant 0 : i32
    return %arg0, %c0_i32 : i32, i32
  }
  func.func @transform_1(%arg0: i32) -> (i32, i32) {
    %c0_i32 = arith.constant 0 : i32
    %c0_i32_0 = arith.constant 0 : i32
    %c0_i32_1 = arith.constant 0 : i32
    return %c0_i32, %c0_i32_0 : i32, i32
  }
  func.func @transform_2(%arg0: i32) -> (i32, i32) {
    %c0_i32 = arith.constant 0 : i32
    %c0_i32_0 = arith.constant 0 : i32
    %c0_i32_1 = arith.constant 0 : i32
    return %c0_i32, %c0_i32_0 : i32, i32
  }
  func.func @transform_3(%arg0: i32) -> (i32, i32) {
    %c0_i32 = arith.constant 0 : i32
    %c0_i32_0 = arith.constant 0 : i32
    %c0_i32_1 = arith.constant 0 : i32
    return %c0_i32, %c0_i32_0 : i32, i32
  }
  func.func @transform_4(%arg0: i32) -> (i32, i32) {
    %c0_i32 = arith.constant 0 : i32
    %c0_i32_0 = arith.constant 0 : i32
    %c0_i32_1 = arith.constant 0 : i32
    return %c0_i32, %c0_i32_0 : i32, i32
  }
  func.func @transform_5(%arg0: i32) -> (i32, i32) {
    %c0_i32 = arith.constant 0 : i32
    %c0_i32_0 = arith.constant 0 : i32
    return %arg0, %c0_i32 : i32, i32
  }
  func.func @transform_6(%arg0: i32) -> (i32, i32) {
    %c0_i32 = arith.constant 0 : i32
    %c0_i32_0 = arith.constant 0 : i32
    return %arg0, %c0_i32 : i32, i32
  }
  func.func @transform_7(%arg0: i32) -> (i32, i32) {
    %c0_i32 = arith.constant 0 : i32
    %c0_i32_0 = arith.constant 0 : i32
    return %arg0, %c0_i32 : i32, i32
  }
}

module attributes {stable_mosaic.version = 11 : i64} {
  func.func @_ln_mlp_kernel(%arg0: i32, %arg1: i32, %arg2: memref<8x32xf32, #tpu.memory_space<vmem>>, %arg3: memref<1x32xf32, #tpu.memory_space<vmem>>, %arg4: memref<1x32xf32, #tpu.memory_space<vmem>>, %arg5: memref<32x128xbf16, #tpu.memory_space<vmem>>, %arg6: memref<1x128xf32, #tpu.memory_space<vmem>>, %arg7: memref<128x32xbf16, #tpu.memory_space<vmem>>, %arg8: memref<1x32xf32, #tpu.memory_space<vmem>>, %arg9: memref<8x32xf32, #tpu.memory_space<vmem>>, %arg10: memref<8x32xbf16, #tpu.memory_space<vmem>>, %arg11: memref<8x32xf32, #tpu.memory_space<vmem>>) attributes {dimension_semantics = [#tpu.dimension_semantics<parallel>, #tpu.dimension_semantics<arbitrary>], iteration_bounds = array<i64: 2, 1>, scalar_prefetch = 0 : i64, scratch_operands = 2 : i64, tpu.core_type = #tpu.core_type<tc>, window_params = [{transform_indices = @transform_0, window_bounds = array<i64: 8, 32>}, {pipeline_mode = #tpu.pipeline_mode<synchronous>, transform_indices = @transform_1, window_bounds = array<i64: 1, 32>}, {pipeline_mode = #tpu.pipeline_mode<synchronous>, transform_indices = @transform_2, window_bounds = array<i64: 1, 32>}, {transform_indices = @transform_3, window_bounds = array<i64: 32, 128>}, {transform_indices = @transform_4, window_bounds = array<i64: 1, 128>}, {transform_indices = @transform_5, window_bounds = array<i64: 128, 32>}, {pipeline_mode = #tpu.pipeline_mode<synchronous>, transform_indices = @transform_6, window_bounds = array<i64: 1, 32>}, {transform_indices = @transform_7, window_bounds = array<i64: 8, 32>}]} {
    %c0_i32 = arith.constant 0 : i32
    %0 = arith.cmpi eq, %arg1, %c0_i32 : i32
    %1 = arith.extui %0 : i1 to i32
    %c0_i32_0 = arith.constant 0 : i32
    %2 = arith.cmpi ne, %1, %c0_i32_0 : i32
    scf.if %2 {
      %c0_18 = arith.constant 0 : index
      %c0_19 = arith.constant 0 : index
      %26 = vector.load %arg2[%c0_18, %c0_19] : memref<8x32xf32, #tpu.memory_space<vmem>>, vector<8x32xf32>
      %c0_20 = arith.constant 0 : index
      %c0_21 = arith.constant 0 : index
      %27 = vector.load %arg3[%c0_20, %c0_21] : memref<1x32xf32, #tpu.memory_space<vmem>>, vector<1x32xf32>
      %c0_22 = arith.constant 0 : index
      %c0_23 = arith.constant 0 : index
      %28 = vector.load %arg4[%c0_22, %c0_23] : memref<1x32xf32, #tpu.memory_space<vmem>>, vector<1x32xf32>
      %cst_24 = arith.constant dense<0.000000e+00> : vector<8xf32>
      %29 = vector.multi_reduction <add>, %26, %cst_24 [1] : vector<8x32xf32> to vector<8xf32>
      %30 = vector.shape_cast %29 : vector<8xf32> to vector<8x1xf32>
      %cst_25 = arith.constant 3.200000e+01 : f32
      %31 = vector.broadcast %cst_25 : f32 to vector<8x1xf32>
      %32 = arith.divf %30, %31 : vector<8x1xf32>
      %33 = vector.broadcast %32 : vector<8x1xf32> to vector<8x32xf32>
      %34 = arith.subf %26, %33 : vector<8x32xf32>
      %35 = arith.mulf %34, %34 : vector<8x32xf32>
      %cst_26 = arith.constant dense<0.000000e+00> : vector<8xf32>
      %36 = vector.multi_reduction <add>, %35, %cst_26 [1] : vector<8x32xf32> to vector<8xf32>
      %37 = vector.shape_cast %36 : vector<8xf32> to vector<8x1xf32>
      %cst_27 = arith.constant 3.200000e+01 : f32
      %38 = vector.broadcast %cst_27 : f32 to vector<8x1xf32>
      %39 = arith.divf %37, %38 : vector<8x1xf32>
      %cst_28 = arith.constant 9.99999974E-6 : f32
      %40 = vector.broadcast %cst_28 : f32 to vector<8x1xf32>
      %41 = arith.addf %39, %40 : vector<8x1xf32>
      %42 = math.rsqrt %41 : vector<8x1xf32>
      %43 = vector.broadcast %42 : vector<8x1xf32> to vector<8x32xf32>
      %44 = arith.mulf %34, %43 : vector<8x32xf32>
      %45 = vector.broadcast %27 : vector<1x32xf32> to vector<8x32xf32>
      %46 = arith.mulf %44, %45 : vector<8x32xf32>
      %47 = vector.broadcast %28 : vector<1x32xf32> to vector<8x32xf32>
      %48 = arith.addf %46, %47 : vector<8x32xf32>
      %49 = arith.truncf %48 : vector<8x32xf32> to vector<8x32xbf16>
      %c0_29 = arith.constant 0 : index
      %c0_30 = arith.constant 0 : index
      %50 = vector.load %arg10[%c0_29, %c0_30] : memref<8x32xbf16, #tpu.memory_space<vmem>>, vector<8x32xbf16>
      tpu.vector_store %arg10[%c0_29, %c0_30], %49 {strides = array<i32>} : memref<8x32xbf16, #tpu.memory_space<vmem>>, vector<8x32xbf16>,
      %cst_31 = arith.constant 0.000000e+00 : f32
      %51 = vector.broadcast %cst_31 : f32 to vector<8x32xf32>
      %c0_32 = arith.constant 0 : index
      %c0_33 = arith.constant 0 : index
      %52 = vector.load %arg11[%c0_32, %c0_33] : memref<8x32xf32, #tpu.memory_space<vmem>>, vector<8x32xf32>
      tpu.vector_store %arg11[%c0_32, %c0_33], %51 {strides = array<i32>} : memref<8x32xf32, #tpu.memory_space<vmem>>, vector<8x32xf32>,
    } else {
    }
    %c0 = arith.constant 0 : index
    %c0_1 = arith.constant 0 : index
    %3 = vector.load %arg10[%c0, %c0_1] : memref<8x32xbf16, #tpu.memory_space<vmem>>, vector<8x32xbf16>
    %c0_2 = arith.constant 0 : index
    %c0_3 = arith.constant 0 : index
    %4 = vector.load %arg5[%c0_2, %c0_3] : memref<32x128xbf16, #tpu.memory_space<vmem>>, vector<32x128xbf16>
    %cst = arith.constant dense<0.000000e+00> : vector<8x128xf32>
    %5 = tpu.matmul %3, %4, %cst {dimension_numbers = #tpu.dot_dimension_numbers<[1], [0], [0], [1], [0, 0, 1, 1], [], []>} : vector<8x32xbf16>, vector<32x128xbf16>, vector<8x128xf32> -> vector<8x128xf32>
    %c0_4 = arith.constant 0 : index
    %c0_5 = arith.constant 0 : index
    %6 = vector.load %arg6[%c0_4, %c0_5] : memref<1x128xf32, #tpu.memory_space<vmem>>, vector<1x128xf32>
    %7 = vector.broadcast %6 : vector<1x128xf32> to vector<8x128xf32>
    %8 = arith.addf %5, %7 : vector<8x128xf32>
    %cst_6 = arith.constant -1.702000e+00 : f32
    %9 = vector.broadcast %cst_6 : f32 to vector<8x128xf32>
    %10 = arith.mulf %9, %8 : vector<8x128xf32>
    %11 = math.exp %10 : vector<8x128xf32>
    %cst_7 = arith.constant 1.000000e+00 : f32
    %12 = vector.broadcast %cst_7 : f32 to vector<8x128xf32>
    %13 = arith.addf %12, %11 : vector<8x128xf32>
    %cst_8 = arith.constant 1.000000e+00 : f32
    %14 = vector.broadcast %cst_8 : f32 to vector<8x128xf32>
    %15 = arith.divf %14, %13 : vector<8x128xf32>
    %16 = arith.mulf %8, %15 : vector<8x128xf32>
    %c0_9 = arith.constant 0 : index
    %c0_10 = arith.constant 0 : index
    %17 = vector.load %arg11[%c0_9, %c0_10] : memref<8x32xf32, #tpu.memory_space<vmem>>, vector<8x32xf32>
    %18 = arith.truncf %16 : vector<8x128xf32> to vector<8x128xbf16>
    %c0_11 = arith.constant 0 : index
    %c0_12 = arith.constant 0 : index
    %19 = vector.load %arg7[%c0_11, %c0_12] : memref<128x32xbf16, #tpu.memory_space<vmem>>, vector<128x32xbf16>
    %cst_13 = arith.constant dense<0.000000e+00> : vector<8x32xf32>
    %20 = tpu.matmul %18, %19, %cst_13 {dimension_numbers = #tpu.dot_dimension_numbers<[1], [0], [0], [1], [0, 0, 1, 1], [], []>} : vector<8x128xbf16>, vector<128x32xbf16>, vector<8x32xf32> -> vector<8x32xf32>
    %21 = arith.addf %17, %20 : vector<8x32xf32>
    %c0_14 = arith.constant 0 : index
    %c0_15 = arith.constant 0 : index
    %22 = vector.load %arg11[%c0_14, %c0_15] : memref<8x32xf32, #tpu.memory_space<vmem>>, vector<8x32xf32>
    tpu.vector_store %arg11[%c0_14, %c0_15], %21 {strides = array<i32>} : memref<8x32xf32, #tpu.memory_space<vmem>>, vector<8x32xf32>,
    %c0_i32_16 = arith.constant 0 : i32
    %23 = arith.cmpi eq, %arg1, %c0_i32_16 : i32
    %24 = arith.extui %23 : i1 to i32
    %c0_i32_17 = arith.constant 0 : i32
    %25 = arith.cmpi ne, %24, %c0_i32_17 : i32
    scf.if %25 {
      %c0_18 = arith.constant 0 : index
      %c0_19 = arith.constant 0 : index
      %26 = vector.load %arg2[%c0_18, %c0_19] : memref<8x32xf32, #tpu.memory_space<vmem>>, vector<8x32xf32>
      %c0_20 = arith.constant 0 : index
      %c0_21 = arith.constant 0 : index
      %27 = vector.load %arg11[%c0_20, %c0_21] : memref<8x32xf32, #tpu.memory_space<vmem>>, vector<8x32xf32>
      %28 = arith.addf %26, %27 : vector<8x32xf32>
      %c0_22 = arith.constant 0 : index
      %c0_23 = arith.constant 0 : index
      %29 = vector.load %arg8[%c0_22, %c0_23] : memref<1x32xf32, #tpu.memory_space<vmem>>, vector<1x32xf32>
      %30 = vector.broadcast %29 : vector<1x32xf32> to vector<8x32xf32>
      %31 = arith.addf %28, %30 : vector<8x32xf32>
      %c0_24 = arith.constant 0 : index
      %c0_25 = arith.constant 0 : index
      %32 = vector.load %arg9[%c0_24, %c0_25] : memref<8x32xf32, #tpu.memory_space<vmem>>, vector<8x32xf32>
      tpu.vector_store %arg9[%c0_24, %c0_25], %31 {strides = array<i32>} : memref<8x32xf32, #tpu.memory_space<vmem>>, vector<8x32xf32>,
    } else {
    }
    return
  }
  func.func @transform_0(%arg0: i32, %arg1: i32) -> (i32, i32) {
    %c0_i32 = arith.constant 0 : i32
    %c0_i32_0 = arith.constant 0 : i32
    return %arg0, %c0_i32 : i32, i32
  }
  func.func @transform_1(%arg0: i32, %arg1: i32) -> (i32, i32) {
    %c0_i32 = arith.constant 0 : i32
    %c0_i32_0 = arith.constant 0 : i32
    %c0_i32_1 = arith.constant 0 : i32
    return %c0_i32, %c0_i32_0 : i32, i32
  }
  func.func @transform_2(%arg0: i32, %arg1: i32) -> (i32, i32) {
    %c0_i32 = arith.constant 0 : i32
    %c0_i32_0 = arith.constant 0 : i32
    %c0_i32_1 = arith.constant 0 : i32
    return %c0_i32, %c0_i32_0 : i32, i32
  }
  func.func @transform_3(%arg0: i32, %arg1: i32) -> (i32, i32) {
    %c0_i32 = arith.constant 0 : i32
    %c0_i32_0 = arith.constant 0 : i32
    return %c0_i32, %arg1 : i32, i32
  }
  func.func @transform_4(%arg0: i32, %arg1: i32) -> (i32, i32) {
    %c0_i32 = arith.constant 0 : i32
    %c0_i32_0 = arith.constant 0 : i32
    return %c0_i32, %arg1 : i32, i32
  }
  func.func @transform_5(%arg0: i32, %arg1: i32) -> (i32, i32) {
    %c0_i32 = arith.constant 0 : i32
    %c0_i32_0 = arith.constant 0 : i32
    return %arg1, %c0_i32 : i32, i32
  }
  func.func @transform_6(%arg0: i32, %arg1: i32) -> (i32, i32) {
    %c0_i32 = arith.constant 0 : i32
    %c0_i32_0 = arith.constant 0 : i32
    %c0_i32_1 = arith.constant 0 : i32
    return %c0_i32, %c0_i32_0 : i32, i32
  }
  func.func @transform_7(%arg0: i32, %arg1: i32) -> (i32, i32) {
    %c0_i32 = arith.constant 0 : i32
    %c0_i32_0 = arith.constant 0 : i32
    return %arg0, %c0_i32 : i32, i32
  }
}

</mosaic_0001>

<llo_original>
// kernel: transformer_forward.6
$region0: #{transformer_forward.6}
  #allocation0 [shape = 'u32[]', space=smem, size = 0x4, offset = 0x4, fixed_abs, tag = 'smem constant byte address 0x4 - core index']
  #allocation1 [shape = 'u32[144,128]{1,0:T(1,128)}', space=vmem, size = 0x12000, scoped, tag = 'internal scratch']
  %s0 = inlined_call_operand.vmem [shape: f32[16,32], index: 0, kind: input, shape index: {}]
  %s1 = inlined_call_operand.vmem [shape: f32[1,32], index: 1, kind: input, shape index: {}]
  %s2 = inlined_call_operand.vmem [shape: f32[1,32], index: 2, kind: input, shape index: {}]
  %s3 = inlined_call_operand.vmem [shape: bf16[32,96], index: 3, kind: input, shape index: {}]
  %s4 = inlined_call_operand.vmem [shape: f32[1,96], index: 4, kind: input, shape index: {}]
  %s5 = inlined_call_operand.vmem [shape: bf16[16,32], index: 5, kind: output, shape index: {0}]
  %s6 = inlined_call_operand.vmem [shape: bf16[16,32], index: 6, kind: output, shape index: {1}]
  %s7 = inlined_call_operand.vmem [shape: bf16[16,32], index: 7, kind: output, shape index: {2}]
  %8 = xla_tuple %s5, %s6, %s7
  %s9 = sld [smem:[#allocation0]]
  $region69: #{transformer_forward.6} parent=0
    _
  %s11 = ssub.s32 1, %s9
  %s12 = scalar_select 0, %s11, %s9
  loop: start=0, step=1, limit=4
  $region2: #{transformer_forward.6} parent=0 // loop_pre_header
    _
  $region3: #{transformer_forward.6} parent=0 // loop_header
    %s14 = sphi 0, %s18
    %p15 = scmp.ge.s32.totalorder %s14, 4
    %s24 = sphi 0, %s26
    %s27 = sphi 0, %s24
    %s28 = sphi 0, %s27
    %s44 = sphi 0, %s28
    %s48 = sphi 0, %s48
    %s50 = sphi 0, %s48
    %s51 = sphi 0, %s50
    %s65 = sphi 0, %s51
    %s69 = sphi 0, %s69
    %s71 = sphi 0, %s69
    %s72 = sphi 0, %s71
    %s86 = sphi 0, %s72
    %s90 = sphi 0, %s90
    %s92 = sphi 0, %s90
    %s93 = sphi 0, %s92
    %s107 = sphi 0, %s93
    %s111 = sphi 0, %s111
    %s113 = sphi 0, %s111
    %s114 = sphi 0, %s113
    %s128 = sphi 0, %s114
    %s134 = sphi 0, %s136
    %s137 = sphi 0, %s134
    %s138 = sphi 0, %s137
    %s154 = sphi 0, %s138
    %s160 = sphi 0, %s162
    %s163 = sphi 0, %s160
    %s164 = sphi 0, %s163
    %s180 = sphi 0, %s164
    %s186 = sphi 0, %s188
    %s189 = sphi 0, %s186
    %s190 = sphi 0, %s189
    %s206 = sphi 0, %s190
  $region4: #{transformer_forward.6} parent=0 // loop_header_branch
    %17 = sbr.rel (%p15) target = $region8
  $region5: #{transformer_forward.6} parent=0 // loop_body
    %s19 = ssub.s32 %s14, 1
    %s20 = ssub.s32 %s14, 2
    %s21 = sadd.s32 %s14, 1
    %s22 = ssub.s32 %s14, %s21
    %p23 = scmp.eq.s32.totalorder %s22, 0
    %s25 = sadd.s32 %s24, 1
    %s26 = scalar_select %p23, %s24, %s25
    %p29 = pneg %p23
    %p30 = scmp.eq.s32.totalorder %s14, 1
    %p31 = por %p29, %p30
    %p32 = scmp.ne.s32.totalorder %s24, %s27
    %p33 = scmp.eq.s32.totalorder %s14, 0
    %p34 = por %p32, %p33
    %p35 = scmp.ne.s32.totalorder %s24, %s27
    %p36 = scmp.eq.s32.totalorder %s19, 1
    %p37 = por %p35, %p36
    %p38 = scmp.ne.s32.totalorder %s27, %s28
    %p39 = scmp.eq.s32.totalorder %s19, 0
    %p40 = por %p38, %p39
    %p41 = scmp.ne.s32.totalorder %s27, %s28
    %p42 = scmp.eq.s32.totalorder %s20, 1
    %p43 = por %p41, %p42
    %p45 = scmp.ne.s32.totalorder %s28, %s44
    %p46 = scmp.eq.s32.totalorder %s20, 0
    %p47 = por %p45, %p46
    %s49 = sadd.s32 %s48, 1
    %p52 = scmp.eq.s32.totalorder %s14, 1
    %p53 = scmp.ne.s32.totalorder %s48, %s50
    %p54 = scmp.eq.s32.totalorder %s14, 0
    %p55 = por %p53, %p54
    %p56 = scmp.ne.s32.totalorder %s48, %s50
    %p57 = scmp.eq.s32.totalorder %s19, 1
    %p58 = por %p56, %p57
    %p59 = scmp.ne.s32.totalorder %s50, %s51
    %p60 = scmp.eq.s32.totalorder %s19, 0
    %p61 = por %p59, %p60
    %p62 = scmp.ne.s32.totalorder %s50, %s51
    %p63 = scmp.eq.s32.totalorder %s20, 1
    %p64 = por %p62, %p63
    %p66 = scmp.ne.s32.totalorder %s51, %s65
    %p67 = scmp.eq.s32.totalorder %s20, 0
    %p68 = por %p66, %p67
    %s70 = sadd.s32 %s69, 1
    %p73 = scmp.eq.s32.totalorder %s14, 1
    %p74 = scmp.ne.s32.totalorder %s69, %s71
    %p75 = scmp.eq.s32.totalorder %s14, 0
    %p76 = por %p74, %p75
    %p77 = scmp.ne.s32.totalorder %s69, %s71
    %p78 = scmp.eq.s32.totalorder %s19, 1
    %p79 = por %p77, %p78
    %p80 = scmp.ne.s32.totalorder %s71, %s72
    %p81 = scmp.eq.s32.totalorder %s19, 0
    %p82 = por %p80, %p81
    %p83 = scmp.ne.s32.totalorder %s71, %s72
    %p84 = scmp.eq.s32.totalorder %s20, 1
    %p85 = por %p83, %p84
    %p87 = scmp.ne.s32.totalorder %s72, %s86
    %p88 = scmp.eq.s32.totalorder %s20, 0
    %p89 = por %p87, %p88
    %s91 = sadd.s32 %s90, 1
    %p94 = scmp.eq.s32.totalorder %s14, 1
    %p95 = scmp.ne.s32.totalorder %s90, %s92
    %p96 = scmp.eq.s32.totalorder %s14, 0
    %p97 = por %p95, %p96
    %p98 = scmp.ne.s32.totalorder %s90, %s92
    %p99 = scmp.eq.s32.totalorder %s19, 1
    %p100 = por %p98, %p99
    %p101 = scmp.ne.s32.totalorder %s92, %s93
    %p102 = scmp.eq.s32.totalorder %s19, 0
    %p103 = por %p101, %p102
    %p104 = scmp.ne.s32.totalorder %s92, %s93
    %p105 = scmp.eq.s32.totalorder %s20, 1
    %p106 = por %p104, %p105
    %p108 = scmp.ne.s32.totalorder %s93, %s107
    %p109 = scmp.eq.s32.totalorder %s20, 0
    %p110 = por %p108, %p109
    %s112 = sadd.s32 %s111, 1
    %p115 = scmp.eq.s32.totalorder %s14, 1
    %p116 = scmp.ne.s32.totalorder %s111, %s113
    %p117 = scmp.eq.s32.totalorder %s14, 0
    %p118 = por %p116, %p117
    %p119 = scmp.ne.s32.totalorder %s111, %s113
    %p120 = scmp.eq.s32.totalorder %s19, 1
    %p121 = por %p119, %p120
    %p122 = scmp.ne.s32.totalorder %s113, %s114
    %p123 = scmp.eq.s32.totalorder %s19, 0
    %p124 = por %p122, %p123
    %p125 = scmp.ne.s32.totalorder %s113, %s114
    %p126 = scmp.eq.s32.totalorder %s20, 1
    %p127 = por %p125, %p126
    %p129 = scmp.ne.s32.totalorder %s114, %s128
    %p130 = scmp.eq.s32.totalorder %s20, 0
    %p131 = por %p129, %p130
    %s132 = ssub.s32 %s14, %s21
    %p133 = scmp.eq.s32.totalorder %s132, 0
    %s135 = sadd.s32 %s134, 1
    %s136 = scalar_select %p133, %s134, %s135
    %p139 = pneg %p133
    %p140 = scmp.eq.s32.totalorder %s14, 1
    %p141 = por %p139, %p140
    %p142 = scmp.ne.s32.totalorder %s134, %s137
    %p143 = scmp.eq.s32.totalorder %s14, 0
    %p144 = por %p142, %p143
    %p145 = scmp.ne.s32.totalorder %s134, %s137
    %p146 = scmp.eq.s32.totalorder %s19, 1
    %p147 = por %p145, %p146
    %p148 = scmp.ne.s32.totalorder %s137, %s138
    %p149 = scmp.eq.s32.totalorder %s19, 0
    %p150 = por %p148, %p149
    %p151 = scmp.ne.s32.totalorder %s137, %s138
    %p152 = scmp.eq.s32.totalorder %s20, 1
    %p153 = por %p151, %p152
    %p155 = scmp.ne.s32.totalorder %s138, %s154
    %p156 = scmp.eq.s32.totalorder %s20, 0
    %p157 = por %p155, %p156
    %s158 = ssub.s32 %s14, %s21
    %p159 = scmp.eq.s32.totalorder %s158, 0
    %s161 = sadd.s32 %s160, 1
    %s162 = scalar_select %p159, %s160, %s161
    %p165 = pneg %p159
    %p166 = scmp.eq.s32.totalorder %s14, 1
    %p167 = por %p165, %p166
    %p168 = scmp.ne.s32.totalorder %s160, %s163
    %p169 = scmp.eq.s32.totalorder %s14, 0
    %p170 = por %p168, %p169
    %p171 = scmp.ne.s32.totalorder %s160, %s163
    %p172 = scmp.eq.s32.totalorder %s19, 1
    %p173 = por %p171, %p172
    %p174 = scmp.ne.s32.totalorder %s163, %s164
    %p175 = scmp.eq.s32.totalorder %s19, 0
    %p176 = por %p174, %p175
    %p177 = scmp.ne.s32.totalorder %s163, %s164
    %p178 = scmp.eq.s32.totalorder %s20, 1
    %p179 = por %p177, %p178
    %p181 = scmp.ne.s32.totalorder %s164, %s180
    %p182 = scmp.eq.s32.totalorder %s20, 0
    %p183 = por %p181, %p182
    %s184 = ssub.s32 %s14, %s21
    %p185 = scmp.eq.s32.totalorder %s184, 0
    %s187 = sadd.s32 %s186, 1
    %s188 = scalar_select %p185, %s186, %s187
    %p191 = pneg %p185
    %p192 = scmp.eq.s32.totalorder %s14, 1
    %p193 = por %p191, %p192
    %p194 = scmp.ne.s32.totalorder %s186, %s189
    %p195 = scmp.eq.s32.totalorder %s14, 0
    %p196 = por %p194, %p195
    %p197 = scmp.ne.s32.totalorder %s186, %s189
    %p198 = scmp.eq.s32.totalorder %s19, 1
    %p199 = por %p197, %p198
    %p200 = scmp.ne.s32.totalorder %s189, %s190
    %p201 = scmp.eq.s32.totalorder %s19, 0
    %p202 = por %p200, %p201
    %p203 = scmp.ne.s32.totalorder %s189, %s190
    %p204 = scmp.eq.s32.totalorder %s20, 1
    %p205 = por %p203, %p204
    %p207 = scmp.ne.s32.totalorder %s190, %s206
    %p208 = scmp.eq.s32.totalorder %s20, 0
    %p209 = por %p207, %p208
    %p210 = scmp.le.s32.totalorder 1, %s14
    %p211 = scmp.lt.s32.totalorder %s14, 3
    %p212 = pnand %p210, %p211
    %p213 = pneg %p212
    // Predicated region
    $region9: #{transformer_forward.6} parent=5 // pred_check
      _
    $region10: #{transformer_forward.6} parent=5 // pred_check_branch
      %215 = sbr.rel (%p212) target = $region12
    $region11: #{transformer_forward.6} parent=5 // pred_region
      %s216 = ssub.s32 %s14, 1
      // Predicated region
      $region13: #{transformer_forward.6} parent=11 // pred_check
        %p217 = pneg %p61
      $region14: #{transformer_forward.6} parent=11 // pred_check_branch
        %219 = sbr.rel (%p217) target = $region16
      $region15: #{transformer_forward.6} parent=11 // pred_region
        _
      $region16: #{transformer_forward.6} parent=11 // pred_fallthru
        _
      // Predicated region
      $region17: #{transformer_forward.6} parent=11 // pred_check
        %p220 = pneg %p82
      $region18: #{transformer_forward.6} parent=11 // pred_check_branch
        %222 = sbr.rel (%p220) target = $region20
      $region19: #{transformer_forward.6} parent=11 // pred_region
        _
      $region20: #{transformer_forward.6} parent=11 // pred_fallthru
        _
      // Predicated region
      $region21: #{transformer_forward.6} parent=11 // pred_check
        %p223 = pneg %p103
      $region22: #{transformer_forward.6} parent=11 // pred_check_branch
        %225 = sbr.rel (%p223) target = $region24
      $region23: #{transformer_forward.6} parent=11 // pred_region
        _
      $region24: #{transformer_forward.6} parent=11 // pred_fallthru
        _
      // Predicated region
      $region25: #{transformer_forward.6} parent=11 // pred_check
        %p226 = pneg %p124
      $region26: #{transformer_forward.6} parent=11 // pred_check_branch
        %228 = sbr.rel (%p226) target = $region28
      $region27: #{transformer_forward.6} parent=11 // pred_region
        _
      $region28: #{transformer_forward.6} parent=11 // pred_fallthru
        _
    $region12: #{transformer_forward.6} parent=5 // pred_fallthru
      _
    %p229 = scmp.lt.s32.totalorder %s14, 2
    // Predicated region
    $region29: #{transformer_forward.6} parent=5 // pred_check
      %p230 = pneg %p229
    $region30: #{transformer_forward.6} parent=5 // pred_check_branch
      %232 = sbr.rel (%p230) target = $region32
    $region31: #{transformer_forward.6} parent=5 // pred_region
      // Predicated region
      $region33: #{transformer_forward.6} parent=31 // pred_check
        %p233 = pneg %p34
      $region34: #{transformer_forward.6} parent=31 // pred_check_branch
        %235 = sbr.rel (%p233) target = $region36
      $region35: #{transformer_forward.6} parent=31 // pred_region
        %p236 = scmp.lt.s32.totalorder %s14, 1
        %s237 = scalar_select %p236, %s14, 1
        %s238 = smul.addr %s237, 8
        %s239 = scalar_lea.vmem %s0, %s238
      $region36: #{transformer_forward.6} parent=31 // pred_fallthru
        _
    $region32: #{transformer_forward.6} parent=5 // pred_fallthru
      _
    %p240 = scmp.le.s32.totalorder 1, %s14
    %p241 = scmp.lt.s32.totalorder %s14, 3
    %p242 = pnand %p240, %p241
    %p243 = pneg %p242
    // Predicated region
    $region37: #{transformer_forward.6} parent=5 // pred_check
      _
    $region38: #{transformer_forward.6} parent=5 // pred_check_branch
      %245 = sbr.rel (%p242) target = $region40
    $region39: #{transformer_forward.6} parent=5 // pred_region
      %s246 = ssub.s32 %s14, 1
      %p247 = scmp.lt.s32.totalorder %s19, 1
      %s248 = scalar_select %p247, %s19, 1
      %s249 = smul.addr %s248, 8
      %s250 = scalar_lea.vmem %s0, %s249
      %p251 = pneg %p40
      %p252 = pneg %p37
      %p253 = pneg %p61
      %p254 = pneg %p58
      %p255 = pneg %p82
      %p256 = pneg %p79
      %p257 = pneg %p103
      %p258 = pneg %p100
      %p259 = pneg %p124
      %p260 = pneg %p121
      %p261 = pneg %p150
      %p262 = pneg %p147
      %p263 = scmp.lt.s32.totalorder %s19, 1
      %s264 = scalar_select %p263, %s19, 1
      %s265 = smul.addr %s264, 4
      %s266 = scalar_lea.vmem %s5, %s265
      %p267 = pneg %p176
      %p268 = pneg %p173
      %p269 = scmp.lt.s32.totalorder %s19, 1
      %s270 = scalar_select %p269, %s19, 1
      %s271 = smul.addr %s270, 4
      %s272 = scalar_lea.vmem %s6, %s271
      %p273 = pneg %p202
      %p274 = pneg %p199
      %p275 = scmp.lt.s32.totalorder %s19, 1
      %s276 = scalar_select %p275, %s19, 1
      %s277 = smul.addr %s276, 4
      %s278 = scalar_lea.vmem %s7, %s277
      %p279 = scmp.lt.s32.totalorder %s19, 1
      %s280 = scalar_select %p279, %s19, 1
      %s281 = smul.addr %s280, 8
      %s282 = scalar_lea.vmem %s0, %s281
      %p283 = scmp.lt.s32.totalorder %s19, 1
      %s284 = scalar_select %p283, %s19, 1
      %s285 = smul.addr %s284, 4
      %s286 = scalar_lea.vmem %s5, %s285
      %p287 = scmp.lt.s32.totalorder %s19, 1
      %s288 = scalar_select %p287, %s19, 1
      %s289 = smul.addr %s288, 4
      %s290 = scalar_lea.vmem %s6, %s289
      %p291 = scmp.lt.s32.totalorder %s19, 1
      %s292 = scalar_select %p291, %s19, 1
      %s293 = smul.addr %s292, 4
      %s294 = scalar_lea.vmem %s7, %s293
      %v296 = vld [vmem:[%s282] sm:$0xff]
      %v297 = vld [vmem:[%s1] sm:$0x1]
      %v298 = vld [vmem:[%s2] sm:$0x1]
      %vm299 = vcmask 261120
      %v300 = vsel %vm299, %v296, 0.0
      %301 = vadd.xlane.f32.xlu0 %v300
      %v302 = vpop.xlane.xlu0 %301
      %v303 = vrcp.pop 32.0
      %v304 = vmul.f32 %v302, %v303
      %v305 = vsub.f32 %v296, %v304
      %v306 = vmul.f32 %v305, %v305
      %v307 = vsel %vm299, %v306, 0.0
      %308 = vadd.xlane.f32.xlu0 %v307
      %v309 = vpop.xlane.xlu0 %308
      %v310 = vmul.f32 %v309, %v303
      %v311 = vadd.f32 %v310, 1e-05
      %v312 = vrsqrt.pop %v311
      %v313 = vmul.f32 %v305, %v312
      %v315 = vlaneseq
      %v316 = vshrl.u32 %v315, 7
      %v317 = vsub.s32 0, %v316
      %v318 = vrot.slane %v297, %v317
      %v320 = vmul.f32 %v313, %v318
      %v322 = vlaneseq
      %v323 = vshrl.u32 %v322, 7
      %v324 = vsub.s32 0, %v323
      %v325 = vrot.slane %v298, %v324
      %v327 = vadd.f32 %v320, %v325
      %v328 = vpack.c.bf16 %v327, %v327
      %v329 = vld [vmem:[%s3] sm:$0xf]
      %v330 = vld [vmem:[%s3 + $0x4] sm:$0xf]
      %v331 = vld [vmem:[%s3 + $0x8] sm:$0xf]
      %v332 = vld [vmem:[%s3 + $0xc] sm:$0xf]
      %v333 = vld [vmem:[%s4] sm:$0x1]
      %v335 = vlaneseq
      %v336 = vshrl.u32 %v335, 7
      %v337 = vsub.s32 0, %v336
      %v338 = vrot.slane %v333, %v337
      %v344 = vunpack.c.l.b16 %v329
      %v345 = vunpack.c.l.b16 %v330
      %v346 = vunpack.c.l.b16 %v331
      %v347 = vunpack.c.l.b16 %v332
      %v348 = vpack.c.b16 %v345, %v344
      %v349 = vpack.c.b16 %v347, %v346
      %v353 = vsel %vm299, %v328, 0
      %355 = vmatprep.subr.bf16.mxu0 0
      %356 = vmatpush1.bf16.msra.mxu0 %v348
      %357 = vmatprep.subr.bf16.mxu0 0
      %358 = vmatpush1.bf16.msra.mxu0 %v349
      %359 = vmatprep.subr.bf16.mxu0 0
      %360 = vmatpush1.bf16.msra.mxu0 0
      %361 = vmatprep.subr.bf16.mxu0 0
      %362 = vmatpush1.bf16.msra.mxu0 0
      %363 = vmatprep.subr.bf16.mxu0 0
      %364 = vmatpush1.bf16.msra.mxu0 0
      %365 = vmatprep.subr.bf16.mxu0 0
      %366 = vmatpush1.bf16.msra.mxu0 0
      %367 = vmatprep.subr.bf16.mxu0 0
      %368 = vmatpush1.bf16.msra.mxu0 0
      %369 = vmatprep.subr.bf16.mxu0 0
      %370 = vmatpush1.bf16.msra.mxu0 0
      %371 = vmatprep.subr.bf16.mxu0 0
      %372 = vmatpush1.bf16.msra.mxu0 0
      %373 = vmatprep.subr.bf16.mxu0 0
      %374 = vmatpush1.bf16.msra.mxu0 0
      %375 = vmatprep.subr.bf16.mxu0 0
      %376 = vmatpush1.bf16.msra.mxu0 0
      %377 = vmatprep.subr.bf16.mxu0 0
      %378 = vmatpush1.bf16.msra.mxu0 0
      %379 = vmatprep.subr.bf16.mxu0 0
      %380 = vmatpush1.bf16.msra.mxu0 0
      %381 = vmatprep.subr.bf16.mxu0 0
      %382 = vmatpush1.bf16.msra.mxu0 0
      %383 = vmatprep.subr.bf16.mxu0 0
      %384 = vmatpush1.bf16.msra.mxu0 0
      %385 = vmatprep.subr.bf16.mxu0 0
      %386 = vmatpush1.bf16.msra.mxu0 0
      %387 = vmatprep.mubr.bf16.mxu0 0
      %388 = vmatmul.mubr.bf16.gmra.mrb[0].mxu0 %v353
      %v389 = vpop.f32.mrb[0].mxu0
      %v390 = vadd.f32 %v338, %v389
      %v391 = vpop.f32.mrb[0].mxu0
      %v392 = vpop.f32.mrb[0].mxu0
      %v393 = vpop.f32.mrb[0].mxu0
      %394 = vdwg.mxu0
      %v395 = vpack.c.bf16 %v390, %v390
      %vm396 = vcmask 257024
      %397 = vst.msk [vmem:[%s286] sm:$0xf] %vm396, %v395
      %v399 = vunpack.c.l.b16 %v395
      %v400 = vpack.c.b16 %v399, %v399
      %401 = vrot.lane.b32.xlu0 %v400, 96
      %v402 = vpop.permute.xlu0 %401
      %404 = vst.msk [vmem:[%s290] sm:$0xf] %vm396, %v402
      %405 = vrot.lane.b32.xlu0 %v400, 64
      %v406 = vpop.permute.xlu0 %405
      %408 = vst.msk [vmem:[%s294] sm:$0xf] %vm396, %v406
      %p409 = scmp.lt.s32.totalorder %s19, 1
      %s410 = scalar_select %p409, %s19, 1
      %s411 = smul.addr %s410, 4
      %s412 = scalar_lea.vmem %s5, %s411
      %p413 = scmp.lt.s32.totalorder %s19, 1
      %s414 = scalar_select %p413, %s19, 1
      %s415 = smul.addr %s414, 4
      %s416 = scalar_lea.vmem %s6, %s415
      %p417 = scmp.lt.s32.totalorder %s19, 1
      %s418 = scalar_select %p417, %s19, 1
      %s419 = smul.addr %s418, 4
      %s420 = scalar_lea.vmem %s7, %s419
      // Predicated region
      $region41: #{transformer_forward.6} parent=39 // pred_check
        %p421 = pneg %p147
      $region42: #{transformer_forward.6} parent=39 // pred_check_branch
        %423 = sbr.rel (%p421) target = $region44
      $region43: #{transformer_forward.6} parent=39 // pred_region
        _
      $region44: #{transformer_forward.6} parent=39 // pred_fallthru
        _
      // Predicated region
      $region45: #{transformer_forward.6} parent=39 // pred_check
        %p424 = pneg %p173
      $region46: #{transformer_forward.6} parent=39 // pred_check_branch
        %426 = sbr.rel (%p424) target = $region48
      $region47: #{transformer_forward.6} parent=39 // pred_region
        _
      $region48: #{transformer_forward.6} parent=39 // pred_fallthru
        _
      // Predicated region
      $region49: #{transformer_forward.6} parent=39 // pred_check
        %p427 = pneg %p199
      $region50: #{transformer_forward.6} parent=39 // pred_check_branch
        %429 = sbr.rel (%p427) target = $region52
      $region51: #{transformer_forward.6} parent=39 // pred_region
        _
      $region52: #{transformer_forward.6} parent=39 // pred_fallthru
        _
    $region40: #{transformer_forward.6} parent=5 // pred_fallthru
      _
    %p430 = scmp.le.s32.totalorder 2, %s14
    // Predicated region
    $region53: #{transformer_forward.6} parent=5 // pred_check
      %p431 = pneg %p430
    $region54: #{transformer_forward.6} parent=5 // pred_check_branch
      %433 = sbr.rel (%p431) target = $region56
    $region55: #{transformer_forward.6} parent=5 // pred_region
      %s434 = ssub.s32 %s14, 2
      // Predicated region
      $region57: #{transformer_forward.6} parent=55 // pred_check
        %p435 = pneg %p153
      $region58: #{transformer_forward.6} parent=55 // pred_check_branch
        %437 = sbr.rel (%p435) target = $region60
      $region59: #{transformer_forward.6} parent=55 // pred_region
        %p438 = scmp.lt.s32.totalorder %s20, 1
        %s439 = scalar_select %p438, %s20, 1
        %s440 = smul.addr %s439, 4
        %s441 = scalar_lea.vmem %s5, %s440
      $region60: #{transformer_forward.6} parent=55 // pred_fallthru
        _
      // Predicated region
      $region61: #{transformer_forward.6} parent=55 // pred_check
        %p442 = pneg %p179
      $region62: #{transformer_forward.6} parent=55 // pred_check_branch
        %444 = sbr.rel (%p442) target = $region64
      $region63: #{transformer_forward.6} parent=55 // pred_region
        %p445 = scmp.lt.s32.totalorder %s20, 1
        %s446 = scalar_select %p445, %s20, 1
        %s447 = smul.addr %s446, 4
        %s448 = scalar_lea.vmem %s6, %s447
      $region64: #{transformer_forward.6} parent=55 // pred_fallthru
        _
      // Predicated region
      $region65: #{transformer_forward.6} parent=55 // pred_check
        %p449 = pneg %p205
      $region66: #{transformer_forward.6} parent=55 // pred_check_branch
        %451 = sbr.rel (%p449) target = $region68
      $region67: #{transformer_forward.6} parent=55 // pred_region
        %p452 = scmp.lt.s32.totalorder %s20, 1
        %s453 = scalar_select %p452, %s20, 1
        %s454 = smul.addr %s453, 4
        %s455 = scalar_lea.vmem %s7, %s454
      $region68: #{transformer_forward.6} parent=55 // pred_fallthru
        _
    $region56: #{transformer_forward.6} parent=5 // pred_fallthru
      _
  $region6: #{transformer_forward.6} parent=0 // loop_footer
    %s18 = sadd.s32 1, %s14
  $region7: #{transformer_forward.6} parent=0 // loop_footer_branch
    %13 = sbr.rel target = $region3
  $region8: #{transformer_forward.6} parent=0 // loop_exit
    _

// kernel: transformer_forward.7
$region0: #{transformer_forward.7}
  #allocation0 [shape = 'u32[]', space=smem, size = 0x4, offset = 0x4, fixed_abs, tag = 'smem constant byte address 0x4 - core index']
  #allocation1 [shape = 'u32[144,128]{1,0:T(1,128)}', space=vmem, size = 0x12000, scoped, tag = 'internal scratch']
  %s0 = inlined_call_operand.vmem [shape: bf16[2,8,32], index: 0, kind: input, shape index: {}]
  %s1 = inlined_call_operand.vmem [shape: bf16[2,8,32], index: 1, kind: input, shape index: {}]
  %s2 = inlined_call_operand.vmem [shape: bf16[2,8,32], index: 2, kind: input, shape index: {}]
  %s3 = inlined_call_operand.vmem [shape: f32[2,8,32], index: 3, kind: input, shape index: {}]
  %s4 = inlined_call_operand.vmem [shape: bf16[32,32], index: 4, kind: input, shape index: {}]
  %s5 = inlined_call_operand.vmem [shape: f32[1,32], index: 5, kind: input, shape index: {}]
  %s6 = inlined_call_operand.vmem [shape: f32[2,8,32], index: 6, kind: output, shape index: {}]
  %s7 = sld [smem:[#allocation0]]
  $region57: #{transformer_forward.7} parent=0
    _
  %s9 = ssub.s32 1, %s7
  %s10 = scalar_select 0, %s9, %s7
  loop: start=0, step=1, limit=4
  $region2: #{transformer_forward.7} parent=0 // loop_pre_header
    _
  $region3: #{transformer_forward.7} parent=0 // loop_header
    %s12 = sphi 0, %s16
    %p13 = scmp.ge.s32.totalorder %s12, 4
    %s22 = sphi 0, %s24
    %s25 = sphi 0, %s22
    %s26 = sphi 0, %s25
    %s42 = sphi 0, %s26
    %s48 = sphi 0, %s50
    %s51 = sphi 0, %s48
    %s52 = sphi 0, %s51
    %s68 = sphi 0, %s52
    %s74 = sphi 0, %s76
    %s77 = sphi 0, %s74
    %s78 = sphi 0, %s77
    %s94 = sphi 0, %s78
    %s100 = sphi 0, %s102
    %s103 = sphi 0, %s100
    %s104 = sphi 0, %s103
    %s120 = sphi 0, %s104
    %s124 = sphi 0, %s124
    %s126 = sphi 0, %s124
    %s127 = sphi 0, %s126
    %s141 = sphi 0, %s127
    %s145 = sphi 0, %s145
    %s147 = sphi 0, %s145
    %s148 = sphi 0, %s147
    %s162 = sphi 0, %s148
    %s168 = sphi 0, %s170
    %s171 = sphi 0, %s168
    %s172 = sphi 0, %s171
    %s188 = sphi 0, %s172
  $region4: #{transformer_forward.7} parent=0 // loop_header_branch
    %15 = sbr.rel (%p13) target = $region8
  $region5: #{transformer_forward.7} parent=0 // loop_body
    %s17 = ssub.s32 %s12, 1
    %s18 = ssub.s32 %s12, 2
    %s19 = sadd.s32 %s12, 1
    %s20 = ssub.s32 %s12, %s19
    %p21 = scmp.eq.s32.totalorder %s20, 0
    %s23 = sadd.s32 %s22, 1
    %s24 = scalar_select %p21, %s22, %s23
    %p27 = pneg %p21
    %p28 = scmp.eq.s32.totalorder %s12, 1
    %p29 = por %p27, %p28
    %p30 = scmp.ne.s32.totalorder %s22, %s25
    %p31 = scmp.eq.s32.totalorder %s12, 0
    %p32 = por %p30, %p31
    %p33 = scmp.ne.s32.totalorder %s22, %s25
    %p34 = scmp.eq.s32.totalorder %s17, 1
    %p35 = por %p33, %p34
    %p36 = scmp.ne.s32.totalorder %s25, %s26
    %p37 = scmp.eq.s32.totalorder %s17, 0
    %p38 = por %p36, %p37
    %p39 = scmp.ne.s32.totalorder %s25, %s26
    %p40 = scmp.eq.s32.totalorder %s18, 1
    %p41 = por %p39, %p40
    %p43 = scmp.ne.s32.totalorder %s26, %s42
    %p44 = scmp.eq.s32.totalorder %s18, 0
    %p45 = por %p43, %p44
    %s46 = ssub.s32 %s12, %s19
    %p47 = scmp.eq.s32.totalorder %s46, 0
    %s49 = sadd.s32 %s48, 1
    %s50 = scalar_select %p47, %s48, %s49
    %p53 = pneg %p47
    %p54 = scmp.eq.s32.totalorder %s12, 1
    %p55 = por %p53, %p54
    %p56 = scmp.ne.s32.totalorder %s48, %s51
    %p57 = scmp.eq.s32.totalorder %s12, 0
    %p58 = por %p56, %p57
    %p59 = scmp.ne.s32.totalorder %s48, %s51
    %p60 = scmp.eq.s32.totalorder %s17, 1
    %p61 = por %p59, %p60
    %p62 = scmp.ne.s32.totalorder %s51, %s52
    %p63 = scmp.eq.s32.totalorder %s17, 0
    %p64 = por %p62, %p63
    %p65 = scmp.ne.s32.totalorder %s51, %s52
    %p66 = scmp.eq.s32.totalorder %s18, 1
    %p67 = por %p65, %p66
    %p69 = scmp.ne.s32.totalorder %s52, %s68
    %p70 = scmp.eq.s32.totalorder %s18, 0
    %p71 = por %p69, %p70
    %s72 = ssub.s32 %s12, %s19
    %p73 = scmp.eq.s32.totalorder %s72, 0
    %s75 = sadd.s32 %s74, 1
    %s76 = scalar_select %p73, %s74, %s75
    %p79 = pneg %p73
    %p80 = scmp.eq.s32.totalorder %s12, 1
    %p81 = por %p79, %p80
    %p82 = scmp.ne.s32.totalorder %s74, %s77
    %p83 = scmp.eq.s32.totalorder %s12, 0
    %p84 = por %p82, %p83
    %p85 = scmp.ne.s32.totalorder %s74, %s77
    %p86 = scmp.eq.s32.totalorder %s17, 1
    %p87 = por %p85, %p86
    %p88 = scmp.ne.s32.totalorder %s77, %s78
    %p89 = scmp.eq.s32.totalorder %s17, 0
    %p90 = por %p88, %p89
    %p91 = scmp.ne.s32.totalorder %s77, %s78
    %p92 = scmp.eq.s32.totalorder %s18, 1
    %p93 = por %p91, %p92
    %p95 = scmp.ne.s32.totalorder %s78, %s94
    %p96 = scmp.eq.s32.totalorder %s18, 0
    %p97 = por %p95, %p96
    %s98 = ssub.s32 %s12, %s19
    %p99 = scmp.eq.s32.totalorder %s98, 0
    %s101 = sadd.s32 %s100, 1
    %s102 = scalar_select %p99, %s100, %s101
    %p105 = pneg %p99
    %p106 = scmp.eq.s32.totalorder %s12, 1
    %p107 = por %p105, %p106
    %p108 = scmp.ne.s32.totalorder %s100, %s103
    %p109 = scmp.eq.s32.totalorder %s12, 0
    %p110 = por %p108, %p109
    %p111 = scmp.ne.s32.totalorder %s100, %s103
    %p112 = scmp.eq.s32.totalorder %s17, 1
    %p113 = por %p111, %p112
    %p114 = scmp.ne.s32.totalorder %s103, %s104
    %p115 = scmp.eq.s32.totalorder %s17, 0
    %p116 = por %p114, %p115
    %p117 = scmp.ne.s32.totalorder %s103, %s104
    %p118 = scmp.eq.s32.totalorder %s18, 1
    %p119 = por %p117, %p118
    %p121 = scmp.ne.s32.totalorder %s104, %s120
    %p122 = scmp.eq.s32.totalorder %s18, 0
    %p123 = por %p121, %p122
    %s125 = sadd.s32 %s124, 1
    %p128 = scmp.eq.s32.totalorder %s12, 1
    %p129 = scmp.ne.s32.totalorder %s124, %s126
    %p130 = scmp.eq.s32.totalorder %s12, 0
    %p131 = por %p129, %p130
    %p132 = scmp.ne.s32.totalorder %s124, %s126
    %p133 = scmp.eq.s32.totalorder %s17, 1
    %p134 = por %p132, %p133
    %p135 = scmp.ne.s32.totalorder %s126, %s127
    %p136 = scmp.eq.s32.totalorder %s17, 0
    %p137 = por %p135, %p136
    %p138 = scmp.ne.s32.totalorder %s126, %s127
    %p139 = scmp.eq.s32.totalorder %s18, 1
    %p140 = por %p138, %p139
    %p142 = scmp.ne.s32.totalorder %s127, %s141
    %p143 = scmp.eq.s32.totalorder %s18, 0
    %p144 = por %p142, %p143
    %s146 = sadd.s32 %s145, 1
    %p149 = scmp.eq.s32.totalorder %s12, 1
    %p150 = scmp.ne.s32.totalorder %s145, %s147
    %p151 = scmp.eq.s32.totalorder %s12, 0
    %p152 = por %p150, %p151
    %p153 = scmp.ne.s32.totalorder %s145, %s147
    %p154 = scmp.eq.s32.totalorder %s17, 1
    %p155 = por %p153, %p154
    %p156 = scmp.ne.s32.totalorder %s147, %s148
    %p157 = scmp.eq.s32.totalorder %s17, 0
    %p158 = por %p156, %p157
    %p159 = scmp.ne.s32.totalorder %s147, %s148
    %p160 = scmp.eq.s32.totalorder %s18, 1
    %p161 = por %p159, %p160
    %p163 = scmp.ne.s32.totalorder %s148, %s162
    %p164 = scmp.eq.s32.totalorder %s18, 0
    %p165 = por %p163, %p164
    %s166 = ssub.s32 %s12, %s19
    %p167 = scmp.eq.s32.totalorder %s166, 0
    %s169 = sadd.s32 %s168, 1
    %s170 = scalar_select %p167, %s168, %s169
    %p173 = pneg %p167
    %p174 = scmp.eq.s32.totalorder %s12, 1
    %p175 = por %p173, %p174
    %p176 = scmp.ne.s32.totalorder %s168, %s171
    %p177 = scmp.eq.s32.totalorder %s12, 0
    %p178 = por %p176, %p177
    %p179 = scmp.ne.s32.totalorder %s168, %s171
    %p180 = scmp.eq.s32.totalorder %s17, 1
    %p181 = por %p179, %p180
    %p182 = scmp.ne.s32.totalorder %s171, %s172
    %p183 = scmp.eq.s32.totalorder %s17, 0
    %p184 = por %p182, %p183
    %p185 = scmp.ne.s32.totalorder %s171, %s172
    %p186 = scmp.eq.s32.totalorder %s18, 1
    %p187 = por %p185, %p186
    %p189 = scmp.ne.s32.totalorder %s172, %s188
    %p190 = scmp.eq.s32.totalorder %s18, 0
    %p191 = por %p189, %p190
    %p192 = scmp.le.s32.totalorder 1, %s12
    %p193 = scmp.lt.s32.totalorder %s12, 3
    %p194 = pnand %p192, %p193
    %p195 = pneg %p194
    // Predicated region
    $region9: #{transformer_forward.7} parent=5 // pred_check
      _
    $region10: #{transformer_forward.7} parent=5 // pred_check_branch
      %197 = sbr.rel (%p194) target = $region12
    $region11: #{transformer_forward.7} parent=5 // pred_region
      %s198 = ssub.s32 %s12, 1
      // Predicated region
      $region13: #{transformer_forward.7} parent=11 // pred_check
        %p199 = pneg %p137
      $region14: #{transformer_forward.7} parent=11 // pred_check_branch
        %201 = sbr.rel (%p199) target = $region16
      $region15: #{transformer_forward.7} parent=11 // pred_region
        _
      $region16: #{transformer_forward.7} parent=11 // pred_fallthru
        _
      // Predicated region
      $region17: #{transformer_forward.7} parent=11 // pred_check
        %p202 = pneg %p158
      $region18: #{transformer_forward.7} parent=11 // pred_check_branch
        %204 = sbr.rel (%p202) target = $region20
      $region19: #{transformer_forward.7} parent=11 // pred_region
        _
      $region20: #{transformer_forward.7} parent=11 // pred_fallthru
        _
    $region12: #{transformer_forward.7} parent=5 // pred_fallthru
      _
    %p205 = scmp.lt.s32.totalorder %s12, 2
    // Predicated region
    $region21: #{transformer_forward.7} parent=5 // pred_check
      %p206 = pneg %p205
    $region22: #{transformer_forward.7} parent=5 // pred_check_branch
      %208 = sbr.rel (%p206) target = $region24
    $region23: #{transformer_forward.7} parent=5 // pred_region
      // Predicated region
      $region25: #{transformer_forward.7} parent=23 // pred_check
        %p209 = pneg %p32
      $region26: #{transformer_forward.7} parent=23 // pred_check_branch
        %211 = sbr.rel (%p209) target = $region28
      $region27: #{transformer_forward.7} parent=23 // pred_region
        %p212 = scmp.lt.s32.totalorder %s12, 1
        %s213 = scalar_select %p212, %s12, 1
        %s214 = smul.addr %s213, 4
        %s215 = scalar_lea.vmem %s0, %s214
      $region28: #{transformer_forward.7} parent=23 // pred_fallthru
        _
      // Predicated region
      $region29: #{transformer_forward.7} parent=23 // pred_check
        %p216 = pneg %p58
      $region30: #{transformer_forward.7} parent=23 // pred_check_branch
        %218 = sbr.rel (%p216) target = $region32
      $region31: #{transformer_forward.7} parent=23 // pred_region
        %p219 = scmp.lt.s32.totalorder %s12, 1
        %s220 = scalar_select %p219, %s12, 1
        %s221 = smul.addr %s220, 4
        %s222 = scalar_lea.vmem %s1, %s221
      $region32: #{transformer_forward.7} parent=23 // pred_fallthru
        _
      // Predicated region
      $region33: #{transformer_forward.7} parent=23 // pred_check
        %p223 = pneg %p84
      $region34: #{transformer_forward.7} parent=23 // pred_check_branch
        %225 = sbr.rel (%p223) target = $region36
      $region35: #{transformer_forward.7} parent=23 // pred_region
        %p226 = scmp.lt.s32.totalorder %s12, 1
        %s227 = scalar_select %p226, %s12, 1
        %s228 = smul.addr %s227, 4
        %s229 = scalar_lea.vmem %s2, %s228
      $region36: #{transformer_forward.7} parent=23 // pred_fallthru
        _
      // Predicated region
      $region37: #{transformer_forward.7} parent=23 // pred_check
        %p230 = pneg %p110
      $region38: #{transformer_forward.7} parent=23 // pred_check_branch
        %232 = sbr.rel (%p230) target = $region40
      $region39: #{transformer_forward.7} parent=23 // pred_region
        %p233 = scmp.lt.s32.totalorder %s12, 1
        %s234 = scalar_select %p233, %s12, 1
        %s235 = smul.addr %s234, 8
        %s236 = scalar_lea.vmem %s3, %s235
      $region40: #{transformer_forward.7} parent=23 // pred_fallthru
        _
    $region24: #{transformer_forward.7} parent=5 // pred_fallthru
      _
    %p237 = scmp.le.s32.totalorder 1, %s12
    %p238 = scmp.lt.s32.totalorder %s12, 3
    %p239 = pnand %p237, %p238
    %p240 = pneg %p239
    // Predicated region
    $region41: #{transformer_forward.7} parent=5 // pred_check
      _
    $region42: #{transformer_forward.7} parent=5 // pred_check_branch
      %242 = sbr.rel (%p239) target = $region44
    $region43: #{transformer_forward.7} parent=5 // pred_region
      %s243 = ssub.s32 %s12, 1
      %p244 = scmp.lt.s32.totalorder %s17, 1
      %s245 = scalar_select %p244, %s17, 1
      %s246 = smul.addr %s245, 4
      %s247 = scalar_lea.vmem %s0, %s246
      %p248 = pneg %p38
      %p249 = pneg %p35
      %p250 = scmp.lt.s32.totalorder %s17, 1
      %s251 = scalar_select %p250, %s17, 1
      %s252 = smul.addr %s251, 4
      %s253 = scalar_lea.vmem %s1, %s252
      %p254 = pneg %p64
      %p255 = pneg %p61
      %p256 = scmp.lt.s32.totalorder %s17, 1
      %s257 = scalar_select %p256, %s17, 1
      %s258 = smul.addr %s257, 4
      %s259 = scalar_lea.vmem %s2, %s258
      %p260 = pneg %p90
      %p261 = pneg %p87
      %p262 = scmp.lt.s32.totalorder %s17, 1
      %s263 = scalar_select %p262, %s17, 1
      %s264 = smul.addr %s263, 8
      %s265 = scalar_lea.vmem %s3, %s264
      %p266 = pneg %p116
      %p267 = pneg %p113
      %p268 = pneg %p137
      %p269 = pneg %p134
      %p270 = pneg %p158
      %p271 = pneg %p155
      %p272 = pneg %p184
      %p273 = pneg %p181
      %p274 = scmp.lt.s32.totalorder %s17, 1
      %s275 = scalar_select %p274, %s17, 1
      %s276 = smul.addr %s275, 8
      %s277 = scalar_lea.vmem %s6, %s276
      %p278 = scmp.lt.s32.totalorder %s17, 1
      %s279 = scalar_select %p278, %s17, 1
      %s280 = smul.addr %s279, 4
      %s281 = scalar_lea.vmem %s0, %s280
      %p282 = scmp.lt.s32.totalorder %s17, 1
      %s283 = scalar_select %p282, %s17, 1
      %s284 = smul.addr %s283, 4
      %s285 = scalar_lea.vmem %s1, %s284
      %p286 = scmp.lt.s32.totalorder %s17, 1
      %s287 = scalar_select %p286, %s17, 1
      %s288 = smul.addr %s287, 4
      %s289 = scalar_lea.vmem %s2, %s288
      %p290 = scmp.lt.s32.totalorder %s17, 1
      %s291 = scalar_select %p290, %s17, 1
      %s292 = smul.addr %s291, 8
      %s293 = scalar_lea.vmem %s3, %s292
      %p294 = scmp.lt.s32.totalorder %s17, 1
      %s295 = scalar_select %p294, %s17, 1
      %s296 = smul.addr %s295, 8
      %s297 = scalar_lea.vmem %s6, %s296
      %v299 = vld [vmem:[%s281] sm:$0xf]
      %v300 = vld [vmem:[%s285] sm:$0xf]
      %v301 = vld [vmem:[%s289] sm:$0xf]
      %v302 = vld [vmem:[%s293] sm:$0xff]
      %v303 = vld [vmem:[%s5] sm:$0x1]
      %v305 = vlaneseq
      %v306 = vshrl.u32 %v305, 7
      %v307 = vsub.s32 0, %v306
      %v308 = vrot.slane %v303, %v307
      %v310 = vadd.f32 %v302, %v308
      %vm311 = vcmask 64512
      %v313 = vsel %vm311, %v299, 0
      %v316 = vsel %vm311, %v300, 0
      %318 = vmatprep.subr.bf16.mxu0 0
      %319 = vmatpush1.bf16.xpose.msra.mxu0 %v316
      %320 = vmatprep.subr.bf16.mxu0 0
      %321 = vmatpush1.bf16.xpose.msra.mxu0 0
      %322 = vmatprep.subr.bf16.mxu0 0
      %323 = vmatpush1.bf16.xpose.msra.mxu0 0
      %324 = vmatprep.subr.bf16.mxu0 0
      %325 = vmatpush1.bf16.xpose.msra.mxu0 0
      %326 = vmatprep.subr.bf16.mxu0 0
      %327 = vmatpush1.bf16.xpose.msra.mxu0 0
      %328 = vmatprep.subr.bf16.mxu0 0
      %329 = vmatpush1.bf16.xpose.msra.mxu0 0
      %330 = vmatprep.subr.bf16.mxu0 0
      %331 = vmatpush1.bf16.xpose.msra.mxu0 0
      %332 = vmatprep.subr.bf16.mxu0 0
      %333 = vmatpush1.bf16.xpose.msra.mxu0 0
      %334 = vmatprep.subr.bf16.mxu0 0
      %335 = vmatpush1.bf16.xpose.msra.mxu0 0
      %336 = vmatprep.subr.bf16.mxu0 0
      %337 = vmatpush1.bf16.xpose.msra.mxu0 0
      %338 = vmatprep.subr.bf16.mxu0 0
      %339 = vmatpush1.bf16.xpose.msra.mxu0 0
      %340 = vmatprep.subr.bf16.mxu0 0
      %341 = vmatpush1.bf16.xpose.msra.mxu0 0
      %342 = vmatprep.subr.bf16.mxu0 0
      %343 = vmatpush1.bf16.xpose.msra.mxu0 0
      %344 = vmatprep.subr.bf16.mxu0 0
      %345 = vmatpush1.bf16.xpose.msra.mxu0 0
      %346 = vmatprep.subr.bf16.mxu0 0
      %347 = vmatpush1.bf16.xpose.msra.mxu0 0
      %348 = vmatprep.subr.bf16.mxu0 0
      %349 = vmatpush1.bf16.xpose.msra.mxu0 0
      %350 = vmatprep.mubr.bf16.mxu0 0
      %351 = vmatmul.mubr.bf16.gmra.mrb[0].mxu0 %v313
      %v352 = vpop.f32.mrb[0].mxu0
      %v353 = vadd.f32 0.0, %v352
      %v354 = vpop.f32.mrb[0].mxu0
      %v355 = vpop.f32.mrb[0].mxu0
      %v356 = vpop.f32.mrb[0].mxu0
      %357 = vdwg.mxu0
      %v358 = vmul.f32 %v353, 0.35355338
      %v359 = vsel %vm311, %v358, -inf
      %360 = vmax.xlane.f32.xlu0 %v359
      %v361 = vpop.xlane.xlu0 %360
      %v362 = vsub.f32 %v358, %v361
      %v363 = vmul.f32 %v362, 1.442695
      %v364 = vpow.pop %v363
      %v365 = vsel %vm311, %v364, 0.0
      %366 = vadd.xlane.f32.xlu0 %v365
      %v367 = vpop.xlane.xlu0 %366
      %v368 = vrcp.pop %v367
      %v369 = vmul.f32 %v364, %v368
      %v370 = vpack.c.bf16 %v369, %v369
      %v372 = vsel %vm311, %v370, 0
      %vm374 = vcmask 1043456
      %v376 = vsel %vm374, %v301, 0
      %378 = vmatprep.subr.bf16.mxu0 0
      %379 = vmatpush1.bf16.msra.mxu0 %v376
      %380 = vmatprep.subr.bf16.mxu0 0
      %381 = vmatpush1.bf16.msra.mxu0 0
      %382 = vmatprep.subr.bf16.mxu0 0
      %383 = vmatpush1.bf16.msra.mxu0 0
      %384 = vmatprep.subr.bf16.mxu0 0
      %385 = vmatpush1.bf16.msra.mxu0 0
      %386 = vmatprep.subr.bf16.mxu0 0
      %387 = vmatpush1.bf16.msra.mxu0 0
      %388 = vmatprep.subr.bf16.mxu0 0
      %389 = vmatpush1.bf16.msra.mxu0 0
      %390 = vmatprep.subr.bf16.mxu0 0
      %391 = vmatpush1.bf16.msra.mxu0 0
      %392 = vmatprep.subr.bf16.mxu0 0
      %393 = vmatpush1.bf16.msra.mxu0 0
      %394 = vmatprep.subr.bf16.mxu0 0
      %395 = vmatpush1.bf16.msra.mxu0 0
      %396 = vmatprep.subr.bf16.mxu0 0
      %397 = vmatpush1.bf16.msra.mxu0 0
      %398 = vmatprep.subr.bf16.mxu0 0
      %399 = vmatpush1.bf16.msra.mxu0 0
      %400 = vmatprep.subr.bf16.mxu0 0
      %401 = vmatpush1.bf16.msra.mxu0 0
      %402 = vmatprep.subr.bf16.mxu0 0
      %403 = vmatpush1.bf16.msra.mxu0 0
      %404 = vmatprep.subr.bf16.mxu0 0
      %405 = vmatpush1.bf16.msra.mxu0 0
      %406 = vmatprep.subr.bf16.mxu0 0
      %407 = vmatpush1.bf16.msra.mxu0 0
      %408 = vmatprep.subr.bf16.mxu0 0
      %409 = vmatpush1.bf16.msra.mxu0 0
      %410 = vmatprep.mubr.bf16.mxu0 0
      %411 = vmatmul.mubr.bf16.gmra.mrb[0].mxu0 %v372
      %v412 = vpop.f32.mrb[0].mxu0
      %v413 = vadd.f32 0.0, %v412
      %v414 = vpop.f32.mrb[0].mxu0
      %v415 = vpop.f32.mrb[0].mxu0
      %v416 = vpop.f32.mrb[0].mxu0
      %417 = vdwg.mxu0
      %v418 = vpack.c.bf16 %v413, %v413
      %v419 = vld [vmem:[%s4] sm:$0xf]
      %v421 = vsel %vm311, %v418, 0
      %v424 = vsel %vm374, %v419, 0
      %426 = vmatprep.subr.bf16.mxu0 0
      %427 = vmatpush1.bf16.msra.mxu0 %v424
      %428 = vmatprep.subr.bf16.mxu0 0
      %429 = vmatpush1.bf16.msra.mxu0 0
      %430 = vmatprep.subr.bf16.mxu0 0
      %431 = vmatpush1.bf16.msra.mxu0 0
      %432 = vmatprep.subr.bf16.mxu0 0
      %433 = vmatpush1.bf16.msra.mxu0 0
      %434 = vmatprep.subr.bf16.mxu0 0
      %435 = vmatpush1.bf16.msra.mxu0 0
      %436 = vmatprep.subr.bf16.mxu0 0
      %437 = vmatpush1.bf16.msra.mxu0 0
      %438 = vmatprep.subr.bf16.mxu0 0
      %439 = vmatpush1.bf16.msra.mxu0 0
      %440 = vmatprep.subr.bf16.mxu0 0
      %441 = vmatpush1.bf16.msra.mxu0 0
      %442 = vmatprep.subr.bf16.mxu0 0
      %443 = vmatpush1.bf16.msra.mxu0 0
      %444 = vmatprep.subr.bf16.mxu0 0
      %445 = vmatpush1.bf16.msra.mxu0 0
      %446 = vmatprep.subr.bf16.mxu0 0
      %447 = vmatpush1.bf16.msra.mxu0 0
      %448 = vmatprep.subr.bf16.mxu0 0
      %449 = vmatpush1.bf16.msra.mxu0 0
      %450 = vmatprep.subr.bf16.mxu0 0
      %451 = vmatpush1.bf16.msra.mxu0 0
      %452 = vmatprep.subr.bf16.mxu0 0
      %453 = vmatpush1.bf16.msra.mxu0 0
      %454 = vmatprep.subr.bf16.mxu0 0
      %455 = vmatpush1.bf16.msra.mxu0 0
      %456 = vmatprep.subr.bf16.mxu0 0
      %457 = vmatpush1.bf16.msra.mxu0 0
      %458 = vmatprep.mubr.bf16.mxu0 0
      %459 = vmatmul.mubr.bf16.gmra.mrb[0].mxu0 %v421
      %v460 = vpop.f32.mrb[0].mxu0
      %v461 = vadd.f32 0.0, %v460
      %v462 = vpop.f32.mrb[0].mxu0
      %v463 = vpop.f32.mrb[0].mxu0
      %v464 = vpop.f32.mrb[0].mxu0
      %465 = vdwg.mxu0
      %v466 = vadd.f32 %v310, %v461
      %v468 = vunpack.c.l.b16 %v299
      %v469 = vpack.c.b16 %v468, %v468
      %470 = vrot.lane.b32.xlu0 %v469, 120
      %v471 = vpop.permute.xlu0 %470
      %v473 = vunpack.c.l.b16 %v300
      %v474 = vpack.c.b16 %v473, %v473
      %475 = vrot.lane.b32.xlu0 %v474, 120
      %v476 = vpop.permute.xlu0 %475
      %v478 = vsel %vm311, %v471, 0
      %v481 = vsel %vm311, %v476, 0
      %483 = vmatprep.subr.bf16.mxu0 0
      %484 = vmatpush1.bf16.xpose.msra.mxu0 %v481
      %485 = vmatprep.subr.bf16.mxu0 0
      %486 = vmatpush1.bf16.xpose.msra.mxu0 0
      %487 = vmatprep.subr.bf16.mxu0 0
      %488 = vmatpush1.bf16.xpose.msra.mxu0 0
      %489 = vmatprep.subr.bf16.mxu0 0
      %490 = vmatpush1.bf16.xpose.msra.mxu0 0
      %491 = vmatprep.subr.bf16.mxu0 0
      %492 = vmatpush1.bf16.xpose.msra.mxu0 0
      %493 = vmatprep.subr.bf16.mxu0 0
      %494 = vmatpush1.bf16.xpose.msra.mxu0 0
      %495 = vmatprep.subr.bf16.mxu0 0
      %496 = vmatpush1.bf16.xpose.msra.mxu0 0
      %497 = vmatprep.subr.bf16.mxu0 0
      %498 = vmatpush1.bf16.xpose.msra.mxu0 0
      %499 = vmatprep.subr.bf16.mxu0 0
      %500 = vmatpush1.bf16.xpose.msra.mxu0 0
      %501 = vmatprep.subr.bf16.mxu0 0
      %502 = vmatpush1.bf16.xpose.msra.mxu0 0
      %503 = vmatprep.subr.bf16.mxu0 0
      %504 = vmatpush1.bf16.xpose.msra.mxu0 0
      %505 = vmatprep.subr.bf16.mxu0 0
      %506 = vmatpush1.bf16.xpose.msra.mxu0 0
      %507 = vmatprep.subr.bf16.mxu0 0
      %508 = vmatpush1.bf16.xpose.msra.mxu0 0
      %509 = vmatprep.subr.bf16.mxu0 0
      %510 = vmatpush1.bf16.xpose.msra.mxu0 0
      %511 = vmatprep.subr.bf16.mxu0 0
      %512 = vmatpush1.bf16.xpose.msra.mxu0 0
      %513 = vmatprep.subr.bf16.mxu0 0
      %514 = vmatpush1.bf16.xpose.msra.mxu0 0
      %515 = vmatprep.mubr.bf16.mxu0 0
      %516 = vmatmul.mubr.bf16.gmra.mrb[0].mxu0 %v478
      %v517 = vpop.f32.mrb[0].mxu0
      %v518 = vadd.f32 0.0, %v517
      %v519 = vpop.f32.mrb[0].mxu0
      %v520 = vpop.f32.mrb[0].mxu0
      %v521 = vpop.f32.mrb[0].mxu0
      %522 = vdwg.mxu0
      %v523 = vmul.f32 %v518, 0.35355338
      %v524 = vsel %vm311, %v523, -inf
      %525 = vmax.xlane.f32.xlu0 %v524
      %v526 = vpop.xlane.xlu0 %525
      %v527 = vsub.f32 %v523, %v526
      %v528 = vmul.f32 %v527, 1.442695
      %v529 = vpow.pop %v528
      %v530 = vsel %vm311, %v529, 0.0
      %531 = vadd.xlane.f32.xlu0 %v530
      %v532 = vpop.xlane.xlu0 %531
      %v533 = vrcp.pop %v532
      %v534 = vmul.f32 %v529, %v533
      %v535 = vpack.c.bf16 %v534, %v534
      %v537 = vunpack.c.l.b16 %v301
      %v538 = vpack.c.b16 %v537, %v537
      %539 = vrot.lane.b32.xlu0 %v538, 120
      %v540 = vpop.permute.xlu0 %539
      %v542 = vsel %vm311, %v535, 0
      %v545 = vsel %vm374, %v540, 0
      %547 = vmatprep.subr.bf16.mxu0 0
      %548 = vmatpush1.bf16.msra.mxu0 %v545
      %549 = vmatprep.subr.bf16.mxu0 0
      %550 = vmatpush1.bf16.msra.mxu0 0
      %551 = vmatprep.subr.bf16.mxu0 0
      %552 = vmatpush1.bf16.msra.mxu0 0
      %553 = vmatprep.subr.bf16.mxu0 0
      %554 = vmatpush1.bf16.msra.mxu0 0
      %555 = vmatprep.subr.bf16.mxu0 0
      %556 = vmatpush1.bf16.msra.mxu0 0
      %557 = vmatprep.subr.bf16.mxu0 0
      %558 = vmatpush1.bf16.msra.mxu0 0
      %559 = vmatprep.subr.bf16.mxu0 0
      %560 = vmatpush1.bf16.msra.mxu0 0
      %561 = vmatprep.subr.bf16.mxu0 0
      %562 = vmatpush1.bf16.msra.mxu0 0
      %563 = vmatprep.subr.bf16.mxu0 0
      %564 = vmatpush1.bf16.msra.mxu0 0
      %565 = vmatprep.subr.bf16.mxu0 0
      %566 = vmatpush1.bf16.msra.mxu0 0
      %567 = vmatprep.subr.bf16.mxu0 0
      %568 = vmatpush1.bf16.msra.mxu0 0
      %569 = vmatprep.subr.bf16.mxu0 0
      %570 = vmatpush1.bf16.msra.mxu0 0
      %571 = vmatprep.subr.bf16.mxu0 0
      %572 = vmatpush1.bf16.msra.mxu0 0
      %573 = vmatprep.subr.bf16.mxu0 0
      %574 = vmatpush1.bf16.msra.mxu0 0
      %575 = vmatprep.subr.bf16.mxu0 0
      %576 = vmatpush1.bf16.msra.mxu0 0
      %577 = vmatprep.subr.bf16.mxu0 0
      %578 = vmatpush1.bf16.msra.mxu0 0
      %579 = vmatprep.mubr.bf16.mxu0 0
      %580 = vmatmul.mubr.bf16.gmra.mrb[0].mxu0 %v542
      %v581 = vpop.f32.mrb[0].mxu0
      %v582 = vadd.f32 0.0, %v581
      %v583 = vpop.f32.mrb[0].mxu0
      %v584 = vpop.f32.mrb[0].mxu0
      %v585 = vpop.f32.mrb[0].mxu0
      %586 = vdwg.mxu0
      %v587 = vpack.c.bf16 %v582, %v582
      %v588 = vld [vmem:[%s4 + $0x4] sm:$0xf]
      %v590 = vsel %vm311, %v587, 0
      %v593 = vsel %vm374, %v588, 0
      %595 = vmatprep.subr.bf16.mxu0 0
      %596 = vmatpush1.bf16.msra.mxu0 %v593
      %597 = vmatprep.subr.bf16.mxu0 0
      %598 = vmatpush1.bf16.msra.mxu0 0
      %599 = vmatprep.subr.bf16.mxu0 0
      %600 = vmatpush1.bf16.msra.mxu0 0
      %601 = vmatprep.subr.bf16.mxu0 0
      %602 = vmatpush1.bf16.msra.mxu0 0
      %603 = vmatprep.subr.bf16.mxu0 0
      %604 = vmatpush1.bf16.msra.mxu0 0
      %605 = vmatprep.subr.bf16.mxu0 0
      %606 = vmatpush1.bf16.msra.mxu0 0
      %607 = vmatprep.subr.bf16.mxu0 0
      %608 = vmatpush1.bf16.msra.mxu0 0
      %609 = vmatprep.subr.bf16.mxu0 0
      %610 = vmatpush1.bf16.msra.mxu0 0
      %611 = vmatprep.subr.bf16.mxu0 0
      %612 = vmatpush1.bf16.msra.mxu0 0
      %613 = vmatprep.subr.bf16.mxu0 0
      %614 = vmatpush1.bf16.msra.mxu0 0
      %615 = vmatprep.subr.bf16.mxu0 0
      %616 = vmatpush1.bf16.msra.mxu0 0
      %617 = vmatprep.subr.bf16.mxu0 0
      %618 = vmatpush1.bf16.msra.mxu0 0
      %619 = vmatprep.subr.bf16.mxu0 0
      %620 = vmatpush1.bf16.msra.mxu0 0
      %621 = vmatprep.subr.bf16.mxu0 0
      %622 = vmatpush1.bf16.msra.mxu0 0
      %623 = vmatprep.subr.bf16.mxu0 0
      %624 = vmatpush1.bf16.msra.mxu0 0
      %625 = vmatprep.subr.bf16.mxu0 0
      %626 = vmatpush1.bf16.msra.mxu0 0
      %627 = vmatprep.mubr.bf16.mxu0 0
      %628 = vmatmul.mubr.bf16.gmra.mrb[0].mxu0 %v590
      %v629 = vpop.f32.mrb[0].mxu0
      %v630 = vadd.f32 0.0, %v629
      %v631 = vpop.f32.mrb[0].mxu0
      %v632 = vpop.f32.mrb[0].mxu0
      %v633 = vpop.f32.mrb[0].mxu0
      %634 = vdwg.mxu0
      %v635 = vadd.f32 %v466, %v630
      %636 = vrot.lane.b32.xlu0 %v469, 112
      %v637 = vpop.permute.xlu0 %636
      %638 = vrot.lane.b32.xlu0 %v474, 112
      %v639 = vpop.permute.xlu0 %638
      %v641 = vsel %vm311, %v637, 0
      %v644 = vsel %vm311, %v639, 0
      %646 = vmatprep.subr.bf16.mxu0 0
      %647 = vmatpush1.bf16.xpose.msra.mxu0 %v644
      %648 = vmatprep.subr.bf16.mxu0 0
      %649 = vmatpush1.bf16.xpose.msra.mxu0 0
      %650 = vmatprep.subr.bf16.mxu0 0
      %651 = vmatpush1.bf16.xpose.msra.mxu0 0
      %652 = vmatprep.subr.bf16.mxu0 0
      %653 = vmatpush1.bf16.xpose.msra.mxu0 0
      %654 = vmatprep.subr.bf16.mxu0 0
      %655 = vmatpush1.bf16.xpose.msra.mxu0 0
      %656 = vmatprep.subr.bf16.mxu0 0
      %657 = vmatpush1.bf16.xpose.msra.mxu0 0
      %658 = vmatprep.subr.bf16.mxu0 0
      %659 = vmatpush1.bf16.xpose.msra.mxu0 0
      %660 = vmatprep.subr.bf16.mxu0 0
      %661 = vmatpush1.bf16.xpose.msra.mxu0 0
      %662 = vmatprep.subr.bf16.mxu0 0
      %663 = vmatpush1.bf16.xpose.msra.mxu0 0
      %664 = vmatprep.subr.bf16.mxu0 0
      %665 = vmatpush1.bf16.xpose.msra.mxu0 0
      %666 = vmatprep.subr.bf16.mxu0 0
      %667 = vmatpush1.bf16.xpose.msra.mxu0 0
      %668 = vmatprep.subr.bf16.mxu0 0
      %669 = vmatpush1.bf16.xpose.msra.mxu0 0
      %670 = vmatprep.subr.bf16.mxu0 0
      %671 = vmatpush1.bf16.xpose.msra.mxu0 0
      %672 = vmatprep.subr.bf16.mxu0 0
      %673 = vmatpush1.bf16.xpose.msra.mxu0 0
      %674 = vmatprep.subr.bf16.mxu0 0
      %675 = vmatpush1.bf16.xpose.msra.mxu0 0
      %676 = vmatprep.subr.bf16.mxu0 0
      %677 = vmatpush1.bf16.xpose.msra.mxu0 0
      %678 = vmatprep.mubr.bf16.mxu0 0
      %679 = vmatmul.mubr.bf16.gmra.mrb[0].mxu0 %v641
      %v680 = vpop.f32.mrb[0].mxu0
      %v681 = vadd.f32 0.0, %v680
      %v682 = vpop.f32.mrb[0].mxu0
      %v683 = vpop.f32.mrb[0].mxu0
      %v684 = vpop.f32.mrb[0].mxu0
      %685 = vdwg.mxu0
      %v686 = vmul.f32 %v681, 0.35355338
      %v687 = vsel %vm311, %v686, -inf
      %688 = vmax.xlane.f32.xlu0 %v687
      %v689 = vpop.xlane.xlu0 %688
      %v690 = vsub.f32 %v686, %v689
      %v691 = vmul.f32 %v690, 1.442695
      %v692 = vpow.pop %v691
      %v693 = vsel %vm311, %v692, 0.0
      %694 = vadd.xlane.f32.xlu0 %v693
      %v695 = vpop.xlane.xlu0 %694
      %v696 = vrcp.pop %v695
      %v697 = vmul.f32 %v692, %v696
      %v698 = vpack.c.bf16 %v697, %v697
      %699 = vrot.lane.b32.xlu0 %v538, 112
      %v700 = vpop.permute.xlu0 %699
      %v702 = vsel %vm311, %v698, 0
      %v705 = vsel %vm374, %v700, 0
      %707 = vmatprep.subr.bf16.mxu0 0
      %708 = vmatpush1.bf16.msra.mxu0 %v705
      %709 = vmatprep.subr.bf16.mxu0 0
      %710 = vmatpush1.bf16.msra.mxu0 0
      %711 = vmatprep.subr.bf16.mxu0 0
      %712 = vmatpush1.bf16.msra.mxu0 0
      %713 = vmatprep.subr.bf16.mxu0 0
      %714 = vmatpush1.bf16.msra.mxu0 0
      %715 = vmatprep.subr.bf16.mxu0 0
      %716 = vmatpush1.bf16.msra.mxu0 0
      %717 = vmatprep.subr.bf16.mxu0 0
      %718 = vmatpush1.bf16.msra.mxu0 0
      %719 = vmatprep.subr.bf16.mxu0 0
      %720 = vmatpush1.bf16.msra.mxu0 0
      %721 = vmatprep.subr.bf16.mxu0 0
      %722 = vmatpush1.bf16.msra.mxu0 0
      %723 = vmatprep.subr.bf16.mxu0 0
      %724 = vmatpush1.bf16.msra.mxu0 0
      %725 = vmatprep.subr.bf16.mxu0 0
      %726 = vmatpush1.bf16.msra.mxu0 0
      %727 = vmatprep.subr.bf16.mxu0 0
      %728 = vmatpush1.bf16.msra.mxu0 0
      %729 = vmatprep.subr.bf16.mxu0 0
      %730 = vmatpush1.bf16.msra.mxu0 0
      %731 = vmatprep.subr.bf16.mxu0 0
      %732 = vmatpush1.bf16.msra.mxu0 0
      %733 = vmatprep.subr.bf16.mxu0 0
      %734 = vmatpush1.bf16.msra.mxu0 0
      %735 = vmatprep.subr.bf16.mxu0 0
      %736 = vmatpush1.bf16.msra.mxu0 0
      %737 = vmatprep.subr.bf16.mxu0 0
      %738 = vmatpush1.bf16.msra.mxu0 0
      %739 = vmatprep.mubr.bf16.mxu0 0
      %740 = vmatmul.mubr.bf16.gmra.mrb[0].mxu0 %v702
      %v741 = vpop.f32.mrb[0].mxu0
      %v742 = vadd.f32 0.0, %v741
      %v743 = vpop.f32.mrb[0].mxu0
      %v744 = vpop.f32.mrb[0].mxu0
      %v745 = vpop.f32.mrb[0].mxu0
      %746 = vdwg.mxu0
      %v747 = vpack.c.bf16 %v742, %v742
      %v748 = vld [vmem:[%s4 + $0x8] sm:$0xf]
      %v750 = vsel %vm311, %v747, 0
      %v753 = vsel %vm374, %v748, 0
      %755 = vmatprep.subr.bf16.mxu0 0
      %756 = vmatpush1.bf16.msra.mxu0 %v753
      %757 = vmatprep.subr.bf16.mxu0 0
      %758 = vmatpush1.bf16.msra.mxu0 0
      %759 = vmatprep.subr.bf16.mxu0 0
      %760 = vmatpush1.bf16.msra.mxu0 0
      %761 = vmatprep.subr.bf16.mxu0 0
      %762 = vmatpush1.bf16.msra.mxu0 0
      %763 = vmatprep.subr.bf16.mxu0 0
      %764 = vmatpush1.bf16.msra.mxu0 0
      %765 = vmatprep.subr.bf16.mxu0 0
      %766 = vmatpush1.bf16.msra.mxu0 0
      %767 = vmatprep.subr.bf16.mxu0 0
      %768 = vmatpush1.bf16.msra.mxu0 0
      %769 = vmatprep.subr.bf16.mxu0 0
      %770 = vmatpush1.bf16.msra.mxu0 0
      %771 = vmatprep.subr.bf16.mxu0 0
      %772 = vmatpush1.bf16.msra.mxu0 0
      %773 = vmatprep.subr.bf16.mxu0 0
      %774 = vmatpush1.bf16.msra.mxu0 0
      %775 = vmatprep.subr.bf16.mxu0 0
      %776 = vmatpush1.bf16.msra.mxu0 0
      %777 = vmatprep.subr.bf16.mxu0 0
      %778 = vmatpush1.bf16.msra.mxu0 0
      %779 = vmatprep.subr.bf16.mxu0 0
      %780 = vmatpush1.bf16.msra.mxu0 0
      %781 = vmatprep.subr.bf16.mxu0 0
      %782 = vmatpush1.bf16.msra.mxu0 0
      %783 = vmatprep.subr.bf16.mxu0 0
      %784 = vmatpush1.bf16.msra.mxu0 0
      %785 = vmatprep.subr.bf16.mxu0 0
      %786 = vmatpush1.bf16.msra.mxu0 0
      %787 = vmatprep.mubr.bf16.mxu0 0
      %788 = vmatmul.mubr.bf16.gmra.mrb[0].mxu0 %v750
      %v789 = vpop.f32.mrb[0].mxu0
      %v790 = vadd.f32 0.0, %v789
      %v791 = vpop.f32.mrb[0].mxu0
      %v792 = vpop.f32.mrb[0].mxu0
      %v793 = vpop.f32.mrb[0].mxu0
      %794 = vdwg.mxu0
      %v795 = vadd.f32 %v635, %v790
      %796 = vrot.lane.b32.xlu0 %v469, 104
      %v797 = vpop.permute.xlu0 %796
      %798 = vrot.lane.b32.xlu0 %v474, 104
      %v799 = vpop.permute.xlu0 %798
      %v801 = vsel %vm311, %v797, 0
      %v804 = vsel %vm311, %v799, 0
      %806 = vmatprep.subr.bf16.mxu0 0
      %807 = vmatpush1.bf16.xpose.msra.mxu0 %v804
      %808 = vmatprep.subr.bf16.mxu0 0
      %809 = vmatpush1.bf16.xpose.msra.mxu0 0
      %810 = vmatprep.subr.bf16.mxu0 0
      %811 = vmatpush1.bf16.xpose.msra.mxu0 0
      %812 = vmatprep.subr.bf16.mxu0 0
      %813 = vmatpush1.bf16.xpose.msra.mxu0 0
      %814 = vmatprep.subr.bf16.mxu0 0
      %815 = vmatpush1.bf16.xpose.msra.mxu0 0
      %816 = vmatprep.subr.bf16.mxu0 0
      %817 = vmatpush1.bf16.xpose.msra.mxu0 0
      %818 = vmatprep.subr.bf16.mxu0 0
      %819 = vmatpush1.bf16.xpose.msra.mxu0 0
      %820 = vmatprep.subr.bf16.mxu0 0
      %821 = vmatpush1.bf16.xpose.msra.mxu0 0
      %822 = vmatprep.subr.bf16.mxu0 0
      %823 = vmatpush1.bf16.xpose.msra.mxu0 0
      %824 = vmatprep.subr.bf16.mxu0 0
      %825 = vmatpush1.bf16.xpose.msra.mxu0 0
      %826 = vmatprep.subr.bf16.mxu0 0
      %827 = vmatpush1.bf16.xpose.msra.mxu0 0
      %828 = vmatprep.subr.bf16.mxu0 0
      %829 = vmatpush1.bf16.xpose.msra.mxu0 0
      %830 = vmatprep.subr.bf16.mxu0 0
      %831 = vmatpush1.bf16.xpose.msra.mxu0 0
      %832 = vmatprep.subr.bf16.mxu0 0
      %833 = vmatpush1.bf16.xpose.msra.mxu0 0
      %834 = vmatprep.subr.bf16.mxu0 0
      %835 = vmatpush1.bf16.xpose.msra.mxu0 0
      %836 = vmatprep.subr.bf16.mxu0 0
      %837 = vmatpush1.bf16.xpose.msra.mxu0 0
      %838 = vmatprep.mubr.bf16.mxu0 0
      %839 = vmatmul.mubr.bf16.gmra.mrb[0].mxu0 %v801
      %v840 = vpop.f32.mrb[0].mxu0
      %v841 = vadd.f32 0.0, %v840
      %v842 = vpop.f32.mrb[0].mxu0
      %v843 = vpop.f32.mrb[0].mxu0
      %v844 = vpop.f32.mrb[0].mxu0
      %845 = vdwg.mxu0
      %v846 = vmul.f32 %v841, 0.35355338
      %v847 = vsel %vm311, %v846, -inf
      %848 = vmax.xlane.f32.xlu0 %v847
      %v849 = vpop.xlane.xlu0 %848
      %v850 = vsub.f32 %v846, %v849
      %v851 = vmul.f32 %v850, 1.442695
      %v852 = vpow.pop %v851
      %v853 = vsel %vm311, %v852, 0.0
      %854 = vadd.xlane.f32.xlu0 %v853
      %v855 = vpop.xlane.xlu0 %854
      %v856 = vrcp.pop %v855
      %v857 = vmul.f32 %v852, %v856
      %v858 = vpack.c.bf16 %v857, %v857
      %859 = vrot.lane.b32.xlu0 %v538, 104
      %v860 = vpop.permute.xlu0 %859
      %v862 = vsel %vm311, %v858, 0
      %v865 = vsel %vm374, %v860, 0
      %867 = vmatprep.subr.bf16.mxu0 0
      %868 = vmatpush1.bf16.msra.mxu0 %v865
      %869 = vmatprep.subr.bf16.mxu0 0
      %870 = vmatpush1.bf16.msra.mxu0 0
      %871 = vmatprep.subr.bf16.mxu0 0
      %872 = vmatpush1.bf16.msra.mxu0 0
      %873 = vmatprep.subr.bf16.mxu0 0
      %874 = vmatpush1.bf16.msra.mxu0 0
      %875 = vmatprep.subr.bf16.mxu0 0
      %876 = vmatpush1.bf16.msra.mxu0 0
      %877 = vmatprep.subr.bf16.mxu0 0
      %878 = vmatpush1.bf16.msra.mxu0 0
      %879 = vmatprep.subr.bf16.mxu0 0
      %880 = vmatpush1.bf16.msra.mxu0 0
      %881 = vmatprep.subr.bf16.mxu0 0
      %882 = vmatpush1.bf16.msra.mxu0 0
      %883 = vmatprep.subr.bf16.mxu0 0
      %884 = vmatpush1.bf16.msra.mxu0 0
      %885 = vmatprep.subr.bf16.mxu0 0
      %886 = vmatpush1.bf16.msra.mxu0 0
      %887 = vmatprep.subr.bf16.mxu0 0
      %888 = vmatpush1.bf16.msra.mxu0 0
      %889 = vmatprep.subr.bf16.mxu0 0
      %890 = vmatpush1.bf16.msra.mxu0 0
      %891 = vmatprep.subr.bf16.mxu0 0
      %892 = vmatpush1.bf16.msra.mxu0 0
      %893 = vmatprep.subr.bf16.mxu0 0
      %894 = vmatpush1.bf16.msra.mxu0 0
      %895 = vmatprep.subr.bf16.mxu0 0
      %896 = vmatpush1.bf16.msra.mxu0 0
      %897 = vmatprep.subr.bf16.mxu0 0
      %898 = vmatpush1.bf16.msra.mxu0 0
      %899 = vmatprep.mubr.bf16.mxu0 0
      %900 = vmatmul.mubr.bf16.gmra.mrb[0].mxu0 %v862
      %v901 = vpop.f32.mrb[0].mxu0
      %v902 = vadd.f32 0.0, %v901
      %v903 = vpop.f32.mrb[0].mxu0
      %v904 = vpop.f32.mrb[0].mxu0
      %v905 = vpop.f32.mrb[0].mxu0
      %906 = vdwg.mxu0
      %v907 = vpack.c.bf16 %v902, %v902
      %v908 = vld [vmem:[%s4 + $0xc] sm:$0xf]
      %v910 = vsel %vm311, %v907, 0
      %v913 = vsel %vm374, %v908, 0
      %915 = vmatprep.subr.bf16.mxu0 0
      %916 = vmatpush1.bf16.msra.mxu0 %v913
      %917 = vmatprep.subr.bf16.mxu0 0
      %918 = vmatpush1.bf16.msra.mxu0 0
      %919 = vmatprep.subr.bf16.mxu0 0
      %920 = vmatpush1.bf16.msra.mxu0 0
      %921 = vmatprep.subr.bf16.mxu0 0
      %922 = vmatpush1.bf16.msra.mxu0 0
      %923 = vmatprep.subr.bf16.mxu0 0
      %924 = vmatpush1.bf16.msra.mxu0 0
      %925 = vmatprep.subr.bf16.mxu0 0
      %926 = vmatpush1.bf16.msra.mxu0 0
      %927 = vmatprep.subr.bf16.mxu0 0
      %928 = vmatpush1.bf16.msra.mxu0 0
      %929 = vmatprep.subr.bf16.mxu0 0
      %930 = vmatpush1.bf16.msra.mxu0 0
      %931 = vmatprep.subr.bf16.mxu0 0
      %932 = vmatpush1.bf16.msra.mxu0 0
      %933 = vmatprep.subr.bf16.mxu0 0
      %934 = vmatpush1.bf16.msra.mxu0 0
      %935 = vmatprep.subr.bf16.mxu0 0
      %936 = vmatpush1.bf16.msra.mxu0 0
      %937 = vmatprep.subr.bf16.mxu0 0
      %938 = vmatpush1.bf16.msra.mxu0 0
      %939 = vmatprep.subr.bf16.mxu0 0
      %940 = vmatpush1.bf16.msra.mxu0 0
      %941 = vmatprep.subr.bf16.mxu0 0
      %942 = vmatpush1.bf16.msra.mxu0 0
      %943 = vmatprep.subr.bf16.mxu0 0
      %944 = vmatpush1.bf16.msra.mxu0 0
      %945 = vmatprep.subr.bf16.mxu0 0
      %946 = vmatpush1.bf16.msra.mxu0 0
      %947 = vmatprep.mubr.bf16.mxu0 0
      %948 = vmatmul.mubr.bf16.gmra.mrb[0].mxu0 %v910
      %v949 = vpop.f32.mrb[0].mxu0
      %v950 = vadd.f32 0.0, %v949
      %v951 = vpop.f32.mrb[0].mxu0
      %v952 = vpop.f32.mrb[0].mxu0
      %v953 = vpop.f32.mrb[0].mxu0
      %954 = vdwg.mxu0
      %v955 = vadd.f32 %v795, %v950
      %vm956 = vcmask 261120
      %957 = vst.msk [vmem:[%s297] sm:$0xff] %vm956, %v955
      %p958 = scmp.lt.s32.totalorder %s17, 1
      %s959 = scalar_select %p958, %s17, 1
      %s960 = smul.addr %s959, 8
      %s961 = scalar_lea.vmem %s6, %s960
      // Predicated region
      $region45: #{transformer_forward.7} parent=43 // pred_check
        %p962 = pneg %p181
      $region46: #{transformer_forward.7} parent=43 // pred_check_branch
        %964 = sbr.rel (%p962) target = $region48
      $region47: #{transformer_forward.7} parent=43 // pred_region
        _
      $region48: #{transformer_forward.7} parent=43 // pred_fallthru
        _
    $region44: #{transformer_forward.7} parent=5 // pred_fallthru
      _
    %p965 = scmp.le.s32.totalorder 2, %s12
    // Predicated region
    $region49: #{transformer_forward.7} parent=5 // pred_check
      %p966 = pneg %p965
    $region50: #{transformer_forward.7} parent=5 // pred_check_branch
      %968 = sbr.rel (%p966) target = $region52
    $region51: #{transformer_forward.7} parent=5 // pred_region
      %s969 = ssub.s32 %s12, 2
      // Predicated region
      $region53: #{transformer_forward.7} parent=51 // pred_check
        %p970 = pneg %p187
      $region54: #{transformer_forward.7} parent=51 // pred_check_branch
        %972 = sbr.rel (%p970) target = $region56
      $region55: #{transformer_forward.7} parent=51 // pred_region
        %p973 = scmp.lt.s32.totalorder %s18, 1
        %s974 = scalar_select %p973, %s18, 1
        %s975 = smul.addr %s974, 8
        %s976 = scalar_lea.vmem %s6, %s975
      $region56: #{transformer_forward.7} parent=51 // pred_fallthru
        _
    $region52: #{transformer_forward.7} parent=5 // pred_fallthru
      _
  $region6: #{transformer_forward.7} parent=0 // loop_footer
    %s16 = sadd.s32 1, %s12
  $region7: #{transformer_forward.7} parent=0 // loop_footer_branch
    %11 = sbr.rel target = $region3
  $region8: #{transformer_forward.7} parent=0 // loop_exit
    _

// kernel: transformer_forward.8
$region0: #{transformer_forward.8}
  #allocation0 [shape = 'u32[]', space=smem, size = 0x4, offset = 0x4, fixed_abs, tag = 'smem constant byte address 0x4 - core index']
  #allocation1 [shape = 'u32[144,128]{1,0:T(1,128)}', space=vmem, size = 0x12000, scoped, tag = 'internal scratch']
  #allocation2 [shape = 'bf16[8,32]{1,0:T(8,128)(2,1)}', space=vmem, size = 0x800, scoped, tag = 'scratch operand']
  #allocation3 [shape = 'f32[8,32]{1,0:T(8,128)}', space=vmem, size = 0x1000, scoped, tag = 'scratch operand']
  %s0 = inlined_call_operand.vmem [shape: f32[16,32], index: 0, kind: input, shape index: {}]
  %s1 = inlined_call_operand.vmem [shape: f32[1,32], index: 1, kind: input, shape index: {}]
  %s2 = inlined_call_operand.vmem [shape: f32[1,32], index: 2, kind: input, shape index: {}]
  %s3 = inlined_call_operand.vmem [shape: bf16[32,128], index: 3, kind: input, shape index: {}]
  %s4 = inlined_call_operand.vmem [shape: f32[1,128], index: 4, kind: input, shape index: {}]
  %s5 = inlined_call_operand.vmem [shape: bf16[128,32], index: 5, kind: input, shape index: {}]
  %s6 = inlined_call_operand.vmem [shape: f32[1,32], index: 6, kind: input, shape index: {}]
  %s7 = inlined_call_operand.vmem [shape: f32[16,32], index: 7, kind: output, shape index: {}]
  %s8 = sld [smem:[#allocation0]]
  $region69: #{transformer_forward.8} parent=0
    _
  %s10 = ssub.s32 1, %s8
  %s11 = scalar_select 0, %s10, %s8
  loop: start=0, step=1, limit=4
  $region2: #{transformer_forward.8} parent=0 // loop_pre_header
    _
  $region3: #{transformer_forward.8} parent=0 // loop_header
    %s13 = sphi 0, %s17
    %p14 = scmp.ge.s32.totalorder %s13, 4
    %s20 = sphi 0, %s32
    %s21 = sphi 0, %s28
    %s22 = sphi 0, %s20
    %s23 = sphi 0, %s21
    %s24 = sphi 0, %s22
    %s25 = sphi 0, %s23
    %s35 = sphi 0, %s37
    %s38 = sphi 0, %s35
    %s39 = sphi 0, %s38
    %s55 = sphi 0, %s39
    %s59 = sphi 0, %s59
    %s61 = sphi 0, %s59
    %s62 = sphi 0, %s61
    %s76 = sphi 0, %s62
    %s80 = sphi 0, %s80
    %s82 = sphi 0, %s80
    %s83 = sphi 0, %s82
    %s97 = sphi 0, %s83
    %s103 = sphi 0, %s105
    %s106 = sphi 0, %s103
    %s107 = sphi 0, %s106
    %s123 = sphi 0, %s107
    %s129 = sphi 0, %s131
    %s132 = sphi 0, %s129
    %s133 = sphi 0, %s132
    %s149 = sphi 0, %s133
    %s155 = sphi 0, %s157
    %s158 = sphi 0, %s155
    %s159 = sphi 0, %s158
    %s175 = sphi 0, %s159
    %s179 = sphi 0, %s179
    %s181 = sphi 0, %s179
    %s182 = sphi 0, %s181
    %s196 = sphi 0, %s182
    %s202 = sphi 0, %s204
    %s205 = sphi 0, %s202
    %s206 = sphi 0, %s205
    %s222 = sphi 0, %s206
  $region4: #{transformer_forward.8} parent=0 // loop_header_branch
    %16 = sbr.rel (%p14) target = $region8
  $region5: #{transformer_forward.8} parent=0 // loop_body
    %s18 = ssub.s32 %s13, 1
    %s19 = ssub.s32 %s13, 2
    %s26 = sadd.s32 1, %s21
    %p27 = scmp.ge.s32.totalorder %s26, 1
    %s28 = scalar_select %p27, 0, %s26
    %s29 = sadd.s32 1, %s20
    %s30 = scalar_select %p27, %s29, %s20
    %p31 = scmp.ge.s32.totalorder %s30, 2
    %s32 = scalar_select %p31, 0, %s30
    %s33 = ssub.s32 %s20, %s32
    %p34 = scmp.eq.s32.totalorder %s33, 0
    %s36 = sadd.s32 %s35, 1
    %s37 = scalar_select %p34, %s35, %s36
    %p40 = pneg %p34
    %p41 = scmp.eq.s32.totalorder %s13, 1
    %p42 = por %p40, %p41
    %p43 = scmp.ne.s32.totalorder %s35, %s38
    %p44 = scmp.eq.s32.totalorder %s13, 0
    %p45 = por %p43, %p44
    %p46 = scmp.ne.s32.totalorder %s35, %s38
    %p47 = scmp.eq.s32.totalorder %s18, 1
    %p48 = por %p46, %p47
    %p49 = scmp.ne.s32.totalorder %s38, %s39
    %p50 = scmp.eq.s32.totalorder %s18, 0
    %p51 = por %p49, %p50
    %p52 = scmp.ne.s32.totalorder %s38, %s39
    %p53 = scmp.eq.s32.totalorder %s19, 1
    %p54 = por %p52, %p53
    %p56 = scmp.ne.s32.totalorder %s39, %s55
    %p57 = scmp.eq.s32.totalorder %s19, 0
    %p58 = por %p56, %p57
    %s60 = sadd.s32 %s59, 1
    %p63 = scmp.eq.s32.totalorder %s13, 1
    %p64 = scmp.ne.s32.totalorder %s59, %s61
    %p65 = scmp.eq.s32.totalorder %s13, 0
    %p66 = por %p64, %p65
    %p67 = scmp.ne.s32.totalorder %s59, %s61
    %p68 = scmp.eq.s32.totalorder %s18, 1
    %p69 = por %p67, %p68
    %p70 = scmp.ne.s32.totalorder %s61, %s62
    %p71 = scmp.eq.s32.totalorder %s18, 0
    %p72 = por %p70, %p71
    %p73 = scmp.ne.s32.totalorder %s61, %s62
    %p74 = scmp.eq.s32.totalorder %s19, 1
    %p75 = por %p73, %p74
    %p77 = scmp.ne.s32.totalorder %s62, %s76
    %p78 = scmp.eq.s32.totalorder %s19, 0
    %p79 = por %p77, %p78
    %s81 = sadd.s32 %s80, 1
    %p84 = scmp.eq.s32.totalorder %s13, 1
    %p85 = scmp.ne.s32.totalorder %s80, %s82
    %p86 = scmp.eq.s32.totalorder %s13, 0
    %p87 = por %p85, %p86
    %p88 = scmp.ne.s32.totalorder %s80, %s82
    %p89 = scmp.eq.s32.totalorder %s18, 1
    %p90 = por %p88, %p89
    %p91 = scmp.ne.s32.totalorder %s82, %s83
    %p92 = scmp.eq.s32.totalorder %s18, 0
    %p93 = por %p91, %p92
    %p94 = scmp.ne.s32.totalorder %s82, %s83
    %p95 = scmp.eq.s32.totalorder %s19, 1
    %p96 = por %p94, %p95
    %p98 = scmp.ne.s32.totalorder %s83, %s97
    %p99 = scmp.eq.s32.totalorder %s19, 0
    %p100 = por %p98, %p99
    %s101 = ssub.s32 %s21, %s28
    %p102 = scmp.eq.s32.totalorder %s101, 0
    %s104 = sadd.s32 %s103, 1
    %s105 = scalar_select %p102, %s103, %s104
    %p108 = pneg %p102
    %p109 = scmp.eq.s32.totalorder %s13, 1
    %p110 = por %p108, %p109
    %p111 = scmp.ne.s32.totalorder %s103, %s106
    %p112 = scmp.eq.s32.totalorder %s13, 0
    %p113 = por %p111, %p112
    %p114 = scmp.ne.s32.totalorder %s103, %s106
    %p115 = scmp.eq.s32.totalorder %s18, 1
    %p116 = por %p114, %p115
    %p117 = scmp.ne.s32.totalorder %s106, %s107
    %p118 = scmp.eq.s32.totalorder %s18, 0
    %p119 = por %p117, %p118
    %p120 = scmp.ne.s32.totalorder %s106, %s107
    %p121 = scmp.eq.s32.totalorder %s19, 1
    %p122 = por %p120, %p121
    %p124 = scmp.ne.s32.totalorder %s107, %s123
    %p125 = scmp.eq.s32.totalorder %s19, 0
    %p126 = por %p124, %p125
    %s127 = ssub.s32 %s21, %s28
    %p128 = scmp.eq.s32.totalorder %s127, 0
    %s130 = sadd.s32 %s129, 1
    %s131 = scalar_select %p128, %s129, %s130
    %p134 = pneg %p128
    %p135 = scmp.eq.s32.totalorder %s13, 1
    %p136 = por %p134, %p135
    %p137 = scmp.ne.s32.totalorder %s129, %s132
    %p138 = scmp.eq.s32.totalorder %s13, 0
    %p139 = por %p137, %p138
    %p140 = scmp.ne.s32.totalorder %s129, %s132
    %p141 = scmp.eq.s32.totalorder %s18, 1
    %p142 = por %p140, %p141
    %p143 = scmp.ne.s32.totalorder %s132, %s133
    %p144 = scmp.eq.s32.totalorder %s18, 0
    %p145 = por %p143, %p144
    %p146 = scmp.ne.s32.totalorder %s132, %s133
    %p147 = scmp.eq.s32.totalorder %s19, 1
    %p148 = por %p146, %p147
    %p150 = scmp.ne.s32.totalorder %s133, %s149
    %p151 = scmp.eq.s32.totalorder %s19, 0
    %p152 = por %p150, %p151
    %s153 = ssub.s32 %s21, %s28
    %p154 = scmp.eq.s32.totalorder %s153, 0
    %s156 = sadd.s32 %s155, 1
    %s157 = scalar_select %p154, %s155, %s156
    %p160 = pneg %p154
    %p161 = scmp.eq.s32.totalorder %s13, 1
    %p162 = por %p160, %p161
    %p163 = scmp.ne.s32.totalorder %s155, %s158
    %p164 = scmp.eq.s32.totalorder %s13, 0
    %p165 = por %p163, %p164
    %p166 = scmp.ne.s32.totalorder %s155, %s158
    %p167 = scmp.eq.s32.totalorder %s18, 1
    %p168 = por %p166, %p167
    %p169 = scmp.ne.s32.totalorder %s158, %s159
    %p170 = scmp.eq.s32.totalorder %s18, 0
    %p171 = por %p169, %p170
    %p172 = scmp.ne.s32.totalorder %s158, %s159
    %p173 = scmp.eq.s32.totalorder %s19, 1
    %p174 = por %p172, %p173
    %p176 = scmp.ne.s32.totalorder %s159, %s175
    %p177 = scmp.eq.s32.totalorder %s19, 0
    %p178 = por %p176, %p177
    %s180 = sadd.s32 %s179, 1
    %p183 = scmp.eq.s32.totalorder %s13, 1
    %p184 = scmp.ne.s32.totalorder %s179, %s181
    %p185 = scmp.eq.s32.totalorder %s13, 0
    %p186 = por %p184, %p185
    %p187 = scmp.ne.s32.totalorder %s179, %s181
    %p188 = scmp.eq.s32.totalorder %s18, 1
    %p189 = por %p187, %p188
    %p190 = scmp.ne.s32.totalorder %s181, %s182
    %p191 = scmp.eq.s32.totalorder %s18, 0
    %p192 = por %p190, %p191
    %p193 = scmp.ne.s32.totalorder %s181, %s182
    %p194 = scmp.eq.s32.totalorder %s19, 1
    %p195 = por %p193, %p194
    %p197 = scmp.ne.s32.totalorder %s182, %s196
    %p198 = scmp.eq.s32.totalorder %s19, 0
    %p199 = por %p197, %p198
    %s200 = ssub.s32 %s20, %s32
    %p201 = scmp.eq.s32.totalorder %s200, 0
    %s203 = sadd.s32 %s202, 1
    %s204 = scalar_select %p201, %s202, %s203
    %p207 = pneg %p201
    %p208 = scmp.eq.s32.totalorder %s13, 1
    %p209 = por %p207, %p208
    %p210 = scmp.ne.s32.totalorder %s202, %s205
    %p211 = scmp.eq.s32.totalorder %s13, 0
    %p212 = por %p210, %p211
    %p213 = scmp.ne.s32.totalorder %s202, %s205
    %p214 = scmp.eq.s32.totalorder %s18, 1
    %p215 = por %p213, %p214
    %p216 = scmp.ne.s32.totalorder %s205, %s206
    %p217 = scmp.eq.s32.totalorder %s18, 0
    %p218 = por %p216, %p217
    %p219 = scmp.ne.s32.totalorder %s205, %s206
    %p220 = scmp.eq.s32.totalorder %s19, 1
    %p221 = por %p219, %p220
    %p223 = scmp.ne.s32.totalorder %s206, %s222
    %p224 = scmp.eq.s32.totalorder %s19, 0
    %p225 = por %p223, %p224
    %p226 = scmp.le.s32.totalorder 1, %s13
    %p227 = scmp.lt.s32.totalorder %s13, 3
    %p228 = pnand %p226, %p227
    %p229 = pneg %p228
    // Predicated region
    $region9: #{transformer_forward.8} parent=5 // pred_check
      _
    $region10: #{transformer_forward.8} parent=5 // pred_check_branch
      %231 = sbr.rel (%p228) target = $region12
    $region11: #{transformer_forward.8} parent=5 // pred_region
      %s232 = ssub.s32 %s13, 1
      // Predicated region
      $region13: #{transformer_forward.8} parent=11 // pred_check
        %p233 = pneg %p72
      $region14: #{transformer_forward.8} parent=11 // pred_check_branch
        %235 = sbr.rel (%p233) target = $region16
      $region15: #{transformer_forward.8} parent=11 // pred_region
        _
      $region16: #{transformer_forward.8} parent=11 // pred_fallthru
        _
      // Predicated region
      $region17: #{transformer_forward.8} parent=11 // pred_check
        %p236 = pneg %p93
      $region18: #{transformer_forward.8} parent=11 // pred_check_branch
        %238 = sbr.rel (%p236) target = $region20
      $region19: #{transformer_forward.8} parent=11 // pred_region
        _
      $region20: #{transformer_forward.8} parent=11 // pred_fallthru
        _
      // Predicated region
      $region21: #{transformer_forward.8} parent=11 // pred_check
        %p239 = pneg %p119
      $region22: #{transformer_forward.8} parent=11 // pred_check_branch
        %241 = sbr.rel (%p239) target = $region24
      $region23: #{transformer_forward.8} parent=11 // pred_region
        %p242 = scmp.lt.s32.totalorder %s23, 0
        %s243 = scalar_select %p242, %s23, 0
        %s244 = smul.addr %s243, 4
        %s245 = scalar_lea.vmem %s3, %s244
      $region24: #{transformer_forward.8} parent=11 // pred_fallthru
        _
      // Predicated region
      $region25: #{transformer_forward.8} parent=11 // pred_check
        %p246 = pneg %p145
      $region26: #{transformer_forward.8} parent=11 // pred_check_branch
        %248 = sbr.rel (%p246) target = $region28
      $region27: #{transformer_forward.8} parent=11 // pred_region
        %p249 = scmp.lt.s32.totalorder %s23, 0
        %s250 = scalar_select %p249, %s23, 0
        %s251 = scalar_lea.vmem %s4, %s250
      $region28: #{transformer_forward.8} parent=11 // pred_fallthru
        _
      // Predicated region
      $region29: #{transformer_forward.8} parent=11 // pred_check
        %p252 = pneg %p171
      $region30: #{transformer_forward.8} parent=11 // pred_check_branch
        %254 = sbr.rel (%p252) target = $region32
      $region31: #{transformer_forward.8} parent=11 // pred_region
        %s255 = smul.u32 16, %s23
        %p256 = scmp.lt.s32.totalorder %s255, 15
        %s257 = scalar_select %p256, %s255, 15
        %s258 = smul.addr %s257, 4
        %s259 = scalar_lea.vmem %s5, %s258
        %s260 = smul.u32 16, %s23
      $region32: #{transformer_forward.8} parent=11 // pred_fallthru
        _
      // Predicated region
      $region33: #{transformer_forward.8} parent=11 // pred_check
        %p261 = pneg %p192
      $region34: #{transformer_forward.8} parent=11 // pred_check_branch
        %263 = sbr.rel (%p261) target = $region36
      $region35: #{transformer_forward.8} parent=11 // pred_region
        _
      $region36: #{transformer_forward.8} parent=11 // pred_fallthru
        _
    $region12: #{transformer_forward.8} parent=5 // pred_fallthru
      _
    %p264 = scmp.lt.s32.totalorder %s13, 2
    // Predicated region
    $region37: #{transformer_forward.8} parent=5 // pred_check
      %p265 = pneg %p264
    $region38: #{transformer_forward.8} parent=5 // pred_check_branch
      %267 = sbr.rel (%p265) target = $region40
    $region39: #{transformer_forward.8} parent=5 // pred_region
      // Predicated region
      $region41: #{transformer_forward.8} parent=39 // pred_check
        %p268 = pneg %p45
      $region42: #{transformer_forward.8} parent=39 // pred_check_branch
        %270 = sbr.rel (%p268) target = $region44
      $region43: #{transformer_forward.8} parent=39 // pred_region
        %p271 = scmp.lt.s32.totalorder %s20, 1
        %s272 = scalar_select %p271, %s20, 1
        %s273 = smul.addr %s272, 8
        %s274 = scalar_lea.vmem %s0, %s273
      $region44: #{transformer_forward.8} parent=39 // pred_fallthru
        _
    $region40: #{transformer_forward.8} parent=5 // pred_fallthru
      _
    %p275 = scmp.le.s32.totalorder 1, %s13
    %p276 = scmp.lt.s32.totalorder %s13, 3
    %p277 = pnand %p275, %p276
    %p278 = pneg %p277
    // Predicated region
    $region45: #{transformer_forward.8} parent=5 // pred_check
      _
    $region46: #{transformer_forward.8} parent=5 // pred_check_branch
      %280 = sbr.rel (%p277) target = $region48
    $region47: #{transformer_forward.8} parent=5 // pred_region
      %s281 = ssub.s32 %s13, 1
      %p282 = scmp.lt.s32.totalorder %s22, 1
      %s283 = scalar_select %p282, %s22, 1
      %s284 = smul.addr %s283, 8
      %s285 = scalar_lea.vmem %s0, %s284
      %p286 = pneg %p51
      %p287 = pneg %p48
      %p288 = pneg %p72
      %p289 = pneg %p69
      %p290 = pneg %p93
      %p291 = pneg %p90
      %p292 = scmp.lt.s32.totalorder %s23, 0
      %s293 = scalar_select %p292, %s23, 0
      %s294 = smul.addr %s293, 4
      %s295 = scalar_lea.vmem %s3, %s294
      %p296 = pneg %p119
      %p297 = pneg %p116
      %p298 = scmp.lt.s32.totalorder %s23, 0
      %s299 = scalar_select %p298, %s23, 0
      %s300 = scalar_lea.vmem %s4, %s299
      %p301 = pneg %p145
      %p302 = pneg %p142
      %s303 = smul.u32 16, %s23
      %p304 = scmp.lt.s32.totalorder %s303, 15
      %s305 = scalar_select %p304, %s303, 15
      %s306 = smul.addr %s305, 4
      %s307 = scalar_lea.vmem %s5, %s306
      %p308 = pneg %p171
      %p309 = pneg %p168
      %p310 = pneg %p192
      %p311 = pneg %p189
      %p312 = pneg %p218
      %p313 = pneg %p215
      %p314 = scmp.lt.s32.totalorder %s22, 1
      %s315 = scalar_select %p314, %s22, 1
      %s316 = smul.addr %s315, 8
      %s317 = scalar_lea.vmem %s7, %s316
      %p318 = scmp.lt.s32.totalorder %s22, 1
      %s319 = scalar_select %p318, %s22, 1
      %s320 = smul.addr %s319, 8
      %s321 = scalar_lea.vmem %s0, %s320
      %p322 = scmp.lt.s32.totalorder %s23, 0
      %s323 = scalar_select %p322, %s23, 0
      %s324 = smul.addr %s323, 4
      %s325 = scalar_lea.vmem %s3, %s324
      %p326 = scmp.lt.s32.totalorder %s23, 0
      %s327 = scalar_select %p326, %s23, 0
      %s328 = scalar_lea.vmem %s4, %s327
      %s329 = smul.u32 16, %s23
      %p330 = scmp.lt.s32.totalorder %s329, 15
      %s331 = scalar_select %p330, %s329, 15
      %s332 = smul.addr %s331, 4
      %s333 = scalar_lea.vmem %s5, %s332
      %s334 = smul.u32 16, %s23
      %p335 = scmp.lt.s32.totalorder %s22, 1
      %s336 = scalar_select %p335, %s22, 1
      %s337 = smul.addr %s336, 8
      %s338 = scalar_lea.vmem %s7, %s337
      %p340 = scmp.eq.s32.totalorder %s23, 0
      // Predicated region
      $region49: #{transformer_forward.8} parent=47 // pred_check
        %p341 = pneg %p340
      $region50: #{transformer_forward.8} parent=47 // pred_check_branch
        %343 = sbr.rel (%p341) target = $region52
      $region51: #{transformer_forward.8} parent=47 // pred_region
        %v344 = vld [vmem:[%s321] sm:$0xff]
        %v345 = vld [vmem:[%s1] sm:$0x1]
        %v346 = vld [vmem:[%s2] sm:$0x1]
        %vm347 = vcmask 261120
        %v348 = vsel %vm347, %v344, 0.0
        %349 = vadd.xlane.f32.xlu0 %v348
        %v350 = vpop.xlane.xlu0 %349
        %v351 = vrcp.pop 32.0
        %v352 = vmul.f32 %v350, %v351
        %v353 = vsub.f32 %v344, %v352
        %v354 = vmul.f32 %v353, %v353
        %v355 = vsel %vm347, %v354, 0.0
        %356 = vadd.xlane.f32.xlu0 %v355
        %v357 = vpop.xlane.xlu0 %356
        %v358 = vmul.f32 %v357, %v351
        %v359 = vadd.f32 %v358, 1e-05
        %v360 = vrsqrt.pop %v359
        %v361 = vmul.f32 %v353, %v360
        %v363 = vlaneseq
        %v364 = vshrl.u32 %v363, 7
        %v365 = vsub.s32 0, %v364
        %v366 = vrot.slane %v345, %v365
        %v368 = vmul.f32 %v361, %v366
        %v370 = vlaneseq
        %v371 = vshrl.u32 %v370, 7
        %v372 = vsub.s32 0, %v371
        %v373 = vrot.slane %v346, %v372
        %v375 = vadd.f32 %v368, %v373
        %v376 = vpack.c.bf16 %v375, %v375
        %vm377 = vcmask 257024
        %378 = vst.msk [vmem:[#allocation2] sm:$0xf] %vm377, %v376
        %379 = vst.msk [vmem:[#allocation3] sm:$0xff] %vm347, 0.0
      $region52: #{transformer_forward.8} parent=47 // pred_fallthru
        _
      %v380 = vld [vmem:[#allocation2] sm:$0xf]
      %v381 = vld [vmem:[%s325] sm:$0xf]
      %v382 = vld [vmem:[%s325 + $0x4] sm:$0xf]
      %v383 = vld [vmem:[%s325 + $0x8] sm:$0xf]
      %v384 = vld [vmem:[%s325 + $0xc] sm:$0xf]
      %v385 = vld [vmem:[%s328] sm:$0x1]
      %v387 = vlaneseq
      %v388 = vshrl.u32 %v387, 7
      %v389 = vsub.s32 0, %v388
      %v390 = vrot.slane %v385, %v389
      %v396 = vunpack.c.l.b16 %v381
      %v397 = vunpack.c.l.b16 %v382
      %v398 = vunpack.c.l.b16 %v383
      %v399 = vunpack.c.l.b16 %v384
      %v400 = vpack.c.b16 %v397, %v396
      %v401 = vpack.c.b16 %v399, %v398
      %vm404 = vcmask 261120
      %v406 = vsel %vm404, %v380, 0
      %408 = vmatprep.subr.bf16.mxu0 0
      %409 = vmatpush1.bf16.msra.mxu0 %v400
      %410 = vmatprep.subr.bf16.mxu0 0
      %411 = vmatpush1.bf16.msra.mxu0 %v401
      %412 = vmatprep.subr.bf16.mxu0 0
      %413 = vmatpush1.bf16.msra.mxu0 0
      %414 = vmatprep.subr.bf16.mxu0 0
      %415 = vmatpush1.bf16.msra.mxu0 0
      %416 = vmatprep.subr.bf16.mxu0 0
      %417 = vmatpush1.bf16.msra.mxu0 0
      %418 = vmatprep.subr.bf16.mxu0 0
      %419 = vmatpush1.bf16.msra.mxu0 0
      %420 = vmatprep.subr.bf16.mxu0 0
      %421 = vmatpush1.bf16.msra.mxu0 0
      %422 = vmatprep.subr.bf16.mxu0 0
      %423 = vmatpush1.bf16.msra.mxu0 0
      %424 = vmatprep.subr.bf16.mxu0 0
      %425 = vmatpush1.bf16.msra.mxu0 0
      %426 = vmatprep.subr.bf16.mxu0 0
      %427 = vmatpush1.bf16.msra.mxu0 0
      %428 = vmatprep.subr.bf16.mxu0 0
      %429 = vmatpush1.bf16.msra.mxu0 0
      %430 = vmatprep.subr.bf16.mxu0 0
      %431 = vmatpush1.bf16.msra.mxu0 0
      %432 = vmatprep.subr.bf16.mxu0 0
      %433 = vmatpush1.bf16.msra.mxu0 0
      %434 = vmatprep.subr.bf16.mxu0 0
      %435 = vmatpush1.bf16.msra.mxu0 0
      %436 = vmatprep.subr.bf16.mxu0 0
      %437 = vmatpush1.bf16.msra.mxu0 0
      %438 = vmatprep.subr.bf16.mxu0 0
      %439 = vmatpush1.bf16.msra.mxu0 0
      %440 = vmatprep.mubr.bf16.mxu0 0
      %441 = vmatmul.mubr.bf16.gmra.mrb[0].mxu0 %v406
      %v442 = vpop.f32.mrb[0].mxu0
      %v443 = vadd.f32 %v390, %v442
      %v444 = vpop.f32.mrb[0].mxu0
      %v445 = vpop.f32.mrb[0].mxu0
      %v446 = vpop.f32.mrb[0].mxu0
      %447 = vdwg.mxu0
      %v448 = vmul.f32 %v443, -1.702
      %v449 = vmul.f32 %v448, 1.442695
      %v450 = vpow.pop %v449
      %v451 = vadd.f32 %v450, 1.0
      %v452 = vrcp.pop %v451
      %v453 = vmul.f32 1.0, %v452
      %v454 = vmul.f32 %v443, %v453
      %v455 = vld [vmem:[#allocation3] sm:$0xff]
      %v456 = vpack.c.bf16 %v454, %v454
      %v457 = vld [vmem:[%s333] sm:$0xf]
      %v458 = vld [vmem:[%s333 + $0x4] sm:$0xf]
      %v459 = vld [vmem:[%s333 + $0x8] sm:$0xf]
      %v460 = vld [vmem:[%s333 + $0xc] sm:$0xf]
      %v461 = vld [vmem:[%s333 + $0x10] sm:$0xf]
      %v462 = vld [vmem:[%s333 + $0x14] sm:$0xf]
      %v463 = vld [vmem:[%s333 + $0x18] sm:$0xf]
      %v464 = vld [vmem:[%s333 + $0x1c] sm:$0xf]
      %v465 = vld [vmem:[%s333 + $0x20] sm:$0xf]
      %v466 = vld [vmem:[%s333 + $0x24] sm:$0xf]
      %v467 = vld [vmem:[%s333 + $0x28] sm:$0xf]
      %v468 = vld [vmem:[%s333 + $0x2c] sm:$0xf]
      %v469 = vld [vmem:[%s333 + $0x30] sm:$0xf]
      %v470 = vld [vmem:[%s333 + $0x34] sm:$0xf]
      %v471 = vld [vmem:[%s333 + $0x38] sm:$0xf]
      %v472 = vld [vmem:[%s333 + $0x3c] sm:$0xf]
      %v489 = vunpack.c.l.b16 %v457
      %v490 = vunpack.c.l.b16 %v458
      %v491 = vunpack.c.l.b16 %v459
      %v492 = vunpack.c.l.b16 %v460
      %v493 = vunpack.c.l.b16 %v461
      %v494 = vunpack.c.l.b16 %v462
      %v495 = vunpack.c.l.b16 %v463
      %v496 = vunpack.c.l.b16 %v464
      %v497 = vunpack.c.l.b16 %v465
      %v498 = vunpack.c.l.b16 %v466
      %v499 = vunpack.c.l.b16 %v467
      %v500 = vunpack.c.l.b16 %v468
      %v501 = vunpack.c.l.b16 %v469
      %v502 = vunpack.c.l.b16 %v470
      %v503 = vunpack.c.l.b16 %v471
      %v504 = vunpack.c.l.b16 %v472
      %v505 = vpack.c.b16 %v490, %v489
      %v506 = vpack.c.b16 %v492, %v491
      %v507 = vpack.c.b16 %v494, %v493
      %v508 = vpack.c.b16 %v496, %v495
      %v509 = vpack.c.b16 %v498, %v497
      %v510 = vpack.c.b16 %v500, %v499
      %v511 = vpack.c.b16 %v502, %v501
      %v512 = vpack.c.b16 %v504, %v503
      %521 = vmatprep.subr.bf16.mxu0 0
      %522 = vmatpush1.bf16.msra.mxu0 %v505
      %523 = vmatprep.subr.bf16.mxu0 0
      %524 = vmatpush1.bf16.msra.mxu0 %v506
      %525 = vmatprep.subr.bf16.mxu0 0
      %526 = vmatpush1.bf16.msra.mxu0 %v507
      %527 = vmatprep.subr.bf16.mxu0 0
      %528 = vmatpush1.bf16.msra.mxu0 %v508
      %529 = vmatprep.subr.bf16.mxu0 0
      %530 = vmatpush1.bf16.msra.mxu0 %v509
      %531 = vmatprep.subr.bf16.mxu0 0
      %532 = vmatpush1.bf16.msra.mxu0 %v510
      %533 = vmatprep.subr.bf16.mxu0 0
      %534 = vmatpush1.bf16.msra.mxu0 %v511
      %535 = vmatprep.subr.bf16.mxu0 0
      %536 = vmatpush1.bf16.msra.mxu0 %v512
      %537 = vmatprep.subr.bf16.mxu0 0
      %538 = vmatpush1.bf16.msra.mxu0 0
      %539 = vmatprep.subr.bf16.mxu0 0
      %540 = vmatpush1.bf16.msra.mxu0 0
      %541 = vmatprep.subr.bf16.mxu0 0
      %542 = vmatpush1.bf16.msra.mxu0 0
      %543 = vmatprep.subr.bf16.mxu0 0
      %544 = vmatpush1.bf16.msra.mxu0 0
      %545 = vmatprep.subr.bf16.mxu0 0
      %546 = vmatpush1.bf16.msra.mxu0 0
      %547 = vmatprep.subr.bf16.mxu0 0
      %548 = vmatpush1.bf16.msra.mxu0 0
      %549 = vmatprep.subr.bf16.mxu0 0
      %550 = vmatpush1.bf16.msra.mxu0 0
      %551 = vmatprep.subr.bf16.mxu0 0
      %552 = vmatpush1.bf16.msra.mxu0 0
      %553 = vmatprep.mubr.bf16.mxu0 0
      %554 = vmatmul.mubr.bf16.gmra.mrb[0].mxu0 %v456
      %v555 = vpop.f32.mrb[0].mxu0
      %v556 = vadd.f32 0.0, %v555
      %v557 = vpop.f32.mrb[0].mxu0
      %v558 = vpop.f32.mrb[0].mxu0
      %v559 = vpop.f32.mrb[0].mxu0
      %560 = vdwg.mxu0
      %v561 = vadd.f32 %v455, %v556
      %562 = vst.msk [vmem:[#allocation3] sm:$0xff] %vm404, %v561
      // Predicated region
      $region53: #{transformer_forward.8} parent=47 // pred_check
        %p563 = pneg %p340
      $region54: #{transformer_forward.8} parent=47 // pred_check_branch
        %565 = sbr.rel (%p563) target = $region56
      $region55: #{transformer_forward.8} parent=47 // pred_region
        %v566 = vld [vmem:[%s321] sm:$0xff]
        %v567 = vld [vmem:[#allocation3] sm:$0xff]
        %v568 = vadd.f32 %v566, %v567
        %v569 = vld [vmem:[%s6] sm:$0x1]
        %v571 = vlaneseq
        %v572 = vshrl.u32 %v571, 7
        %v573 = vsub.s32 0, %v572
        %v574 = vrot.slane %v569, %v573
        %v576 = vadd.f32 %v568, %v574
        %577 = vst.msk [vmem:[%s338] sm:$0xff] %vm404, %v576
      $region56: #{transformer_forward.8} parent=47 // pred_fallthru
        _
      %p578 = scmp.lt.s32.totalorder %s22, 1
      %s579 = scalar_select %p578, %s22, 1
      %s580 = smul.addr %s579, 8
      %s581 = scalar_lea.vmem %s7, %s580
      // Predicated region
      $region57: #{transformer_forward.8} parent=47 // pred_check
        %p582 = pneg %p215
      $region58: #{transformer_forward.8} parent=47 // pred_check_branch
        %584 = sbr.rel (%p582) target = $region60
      $region59: #{transformer_forward.8} parent=47 // pred_region
        _
      $region60: #{transformer_forward.8} parent=47 // pred_fallthru
        _
    $region48: #{transformer_forward.8} parent=5 // pred_fallthru
      _
    %p585 = scmp.le.s32.totalorder 2, %s13
    // Predicated region
    $region61: #{transformer_forward.8} parent=5 // pred_check
      %p586 = pneg %p585
    $region62: #{transformer_forward.8} parent=5 // pred_check_branch
      %588 = sbr.rel (%p586) target = $region64
    $region63: #{transformer_forward.8} parent=5 // pred_region
      %s589 = ssub.s32 %s13, 2
      // Predicated region
      $region65: #{transformer_forward.8} parent=63 // pred_check
        %p590 = pneg %p221
      $region66: #{transformer_forward.8} parent=63 // pred_check_branch
        %592 = sbr.rel (%p590) target = $region68
      $region67: #{transformer_forward.8} parent=63 // pred_region
        %p593 = scmp.lt.s32.totalorder %s24, 1
        %s594 = scalar_select %p593, %s24, 1
        %s595 = smul.addr %s594, 8
        %s596 = scalar_lea.vmem %s7, %s595
      $region68: #{transformer_forward.8} parent=63 // pred_fallthru
        _
    $region64: #{transformer_forward.8} parent=5 // pred_fallthru
      _
  $region6: #{transformer_forward.8} parent=0 // loop_footer
    %s17 = sadd.s32 1, %s13
  $region7: #{transformer_forward.8} parent=0 // loop_footer_branch
    %12 = sbr.rel target = $region3
  $region8: #{transformer_forward.8} parent=0 // loop_exit
    _

</llo_original>
